<compile_context>
chip_gen: v7x
topology: tpu7x:2x2x1
jax: 0.10.0
libtpu: 0.0.40
codegen_flags: <defaults>
</compile_context>

<pallas_src>
import math
from functools import partial

import jax
import jax.numpy as jnp
from jax.experimental import pallas as pl
from jax.experimental.pallas import tpu as pltpu

# ----------------------- small synthetic DINOv2 config -----------------------
B = 2
CHANNELS = 3
IMG = 16
PATCH = 8
NUM_PATCHES = (IMG // PATCH) ** 2          # 4
SEQ = NUM_PATCHES + 1                      # 5 (CLS + patches)
SEQ_PAD = 8                                # padded to a full sublane tile
HIDDEN = 32
HEADS = 4
HEAD_DIM = HIDDEN // HEADS                 # 8
LAYERS = 2
MLP = 4 * HIDDEN                           # 128
NUM_CLASSES = 300
NUM_LOGITS = NUM_CLASSES - 1               # 299 CORAL logits
NUM_LOGITS_PAD = 384                       # 3 x 128 -> lane-dense logits store
CPP = CHANNELS * PATCH * PATCH             # 192
LN_EPS = 1e-6
MXU_DTYPE = jnp.bfloat16                   # MXU operands; accumulation stays f32

VMEM = pltpu.MemorySpace.VMEM


# ------------------------------- fused kernel --------------------------------
def _layernorm(x, w, b):
    mu = jnp.mean(x, axis=-1, keepdims=True)
    xc = x - mu
    var = jnp.mean(xc * xc, axis=-1, keepdims=True)
    return xc * jax.lax.rsqrt(var + LN_EPS) * w + b


def _fused_forward_kernel(
    patches_ref, patch_w_ref, add_full_ref, attn_bias_ref,
    ln1_w_ref, ln1_b_ref, qkv_w_ref, qkv_b_ref, o_w_ref, o_b_ref, ls1_ref,
    ln2_w_ref, ln2_b_ref, fc1_w_ref, fc1_b_ref, fc2_w_ref, fc2_b_ref, ls2_ref,
    fln_w_ref, fln_b_ref, coral_w_ref, coral_b_ref,
    *rest, batch, with_loss,
):
    if with_loss:
        labels_ref, logits_ref, loss_ref = rest
    else:
        (logits_ref,) = rest

    bs = batch * SEQ_PAD                   # rows of the (padded) residual stream
    scale = 1.0 / math.sqrt(HEAD_DIM)

    # ---- patch embedding (stride-P conv as one matmul) + CLS/bias/pos-embed add, whole batch ----
    h = (jnp.dot(patches_ref[...], patch_w_ref[...],
                 preferred_element_type=jnp.float32) + add_full_ref[...])        # [bs, D] f32

    bias = attn_bias_ref[...]              # [B*H*SEQ_PAD, B*H*SEQ_PAD] additive mask (hoisted)

    # ---- transformer encoder layers (unrolled; all activations stay in vregs/VMEM) ----
    for l in range(LAYERS):
        # attention block
        hn = _layernorm(h, ln1_w_ref[l], ln1_b_ref[l])
        qkv = (jnp.dot(hn.astype(MXU_DTYPE), qkv_w_ref[l],
                       preferred_element_type=jnp.float32) + qkv_b_ref[l])       # [bs, 3D] f32
        qkv = qkv.astype(MXU_DTYPE)

        # head-major stacking: rows ordered (head, batch, seq) -> [B*HEADS*SEQ_PAD, HEAD_DIM]
        qh = jnp.concatenate(
            [qkv[:, hd * HEAD_DIM:(hd + 1) * HEAD_DIM] for hd in range(HEADS)], axis=0)
        kh = jnp.concatenate(
            [qkv[:, HIDDEN + hd * HEAD_DIM:HIDDEN + (hd + 1) * HEAD_DIM]
             for hd in range(HEADS)], axis=0)
        vh = jnp.concatenate(
            [qkv[:, 2 * HIDDEN + hd * HEAD_DIM:2 * HIDDEN + (hd + 1) * HEAD_DIM]
             for hd in range(HEADS)], axis=0)

        # one block-masked score matmul + one P@V matmul for ALL (batch, head) pairs
        s = jax.lax.dot_general(qh, kh, (((1,), (1,)), ((), ())),
                                preferred_element_type=jnp.float32) * scale + bias
        s = s - jnp.max(s, axis=-1, keepdims=True)
        p = jnp.exp(s)
        p = p * pl.reciprocal(jnp.sum(p, axis=-1, keepdims=True), approx=True)
        ctx = jnp.dot(p.astype(MXU_DTYPE), vh,
                      preferred_element_type=jnp.float32)                         # [B*H*SEQ_PAD, Dh]

        # back to [bs, HIDDEN]: heads concatenated along lanes (aligned 16-row slices)
        ctx = jnp.concatenate([ctx[hd * bs:(hd + 1) * bs, :] for hd in range(HEADS)], axis=1)
        attn_out = (jnp.dot(ctx.astype(MXU_DTYPE), o_w_ref[l],
                            preferred_element_type=jnp.float32) + o_b_ref[l])
        h = h + attn_out * ls1_ref[l]                          # residual + LayerScale1

        # MLP block
        hn2 = _layernorm(h, ln2_w_ref[l], ln2_b_ref[l])
        m = (jnp.dot(hn2.astype(MXU_DTYPE), fc1_w_ref[l],
                     preferred_element_type=jnp.float32) + fc1_b_ref[l])
        m = jax.nn.gelu(m, approximate=True)
        m = (jnp.dot(m.astype(MXU_DTYPE), fc2_w_ref[l],
                     preferred_element_type=jnp.float32) + fc2_b_ref[l])
        h = h + m * ls2_ref[l]                                 # residual + LayerScale2

    # ---- final LayerNorm, CLS rows, CORAL head (VPU reduce), lane-dense logits store ----
    hf = _layernorm(h, fln_w_ref[...], fln_b_ref[...])
    rep = jnp.concatenate(
        [hf[b * SEQ_PAD:b * SEQ_PAD + 1, :] for b in range(batch)], axis=0)       # [B, D]
    y = jnp.sum(rep * coral_w_ref[...], axis=-1, keepdims=True)                    # [B, 1]
    logits = y + coral_b_ref[...]                                                  # [B, NUM_LOGITS_PAD]
    logits_ref[...] = logits

    if with_loss:
        # levels_from_labelbatch: levels[b, j] = 1 if j < label_b ; padded columns masked out
        lab = labels_ref[...]                                                      # [B, 1] int32
        idx = jax.lax.broadcasted_iota(jnp.int32, (batch, NUM_LOGITS_PAD), 1)
        levels = (idx < lab).astype(jnp.float32)
        valid = (idx < NUM_LOGITS).astype(jnp.float32)
        # numerically stable log-sigmoid CORAL loss, mean reduction
        log_sig = jnp.minimum(logits, 0.0) - jnp.log(1.0 + jnp.exp(-jnp.abs(logits)))
        term = (log_sig * levels + (log_sig - logits) * (1.0 - levels)) * valid
        per_ex = jnp.sum(term, axis=-1, keepdims=True)                             # [B, 1]
        loss_ref[...] = -jnp.sum(per_ex, axis=0, keepdims=True) * (1.0 / batch)    # [1, 1]


# -------------------------------- parameters ---------------------------------
def init_params(key):
    def nrm(k, shape, std=0.02):
        return std * jax.random.normal(k, shape, jnp.float32)

    keys = iter(jax.random.split(key, 64))
    params = {
        "patch_w": nrm(next(keys), (HIDDEN, CHANNELS, PATCH, PATCH)),   # conv weight, PyTorch layout
        "patch_b": jnp.zeros((HIDDEN,), jnp.float32),
        "cls_token": nrm(next(keys), (1, 1, HIDDEN)),
        "pos_embed": nrm(next(keys), (1, SEQ, HIDDEN)),
        "final_ln_w": jnp.ones((HIDDEN,), jnp.float32),
        "final_ln_b": jnp.zeros((HIDDEN,), jnp.float32),
        "coral_w": nrm(next(keys), (HIDDEN, 1)),
        # CoralLayer preinit_bias=True: arange(num_classes-1, 0, -1) / (num_classes-1)
        "coral_b": jnp.arange(NUM_CLASSES - 1, 0, -1, dtype=jnp.float32) / (NUM_CLASSES - 1),
        "layers": [],
    }
    for _ in range(LAYERS):
        params["layers"].append({
            "ln1_w": jnp.ones((HIDDEN,), jnp.float32), "ln1_b": jnp.zeros((HIDDEN,), jnp.float32),
            "q_w": nrm(next(keys), (HIDDEN, HIDDEN)), "q_b": jnp.zeros((HIDDEN,), jnp.float32),
            "k_w": nrm(next(keys), (HIDDEN, HIDDEN)), "k_b": jnp.zeros((HIDDEN,), jnp.float32),
            "v_w": nrm(next(keys), (HIDDEN, HIDDEN)), "v_b": jnp.zeros((HIDDEN,), jnp.float32),
            "o_w": nrm(next(keys), (HIDDEN, HIDDEN)), "o_b": jnp.zeros((HIDDEN,), jnp.float32),
            "ls1": jnp.ones((HIDDEN,), jnp.float32),            # Dinov2 LayerScale init = 1.0
            "ln2_w": jnp.ones((HIDDEN,), jnp.float32), "ln2_b": jnp.zeros((HIDDEN,), jnp.float32),
            "fc1_w": nrm(next(keys), (HIDDEN, MLP)), "fc1_b": jnp.zeros((MLP,), jnp.float32),
            "fc2_w": nrm(next(keys), (MLP, HIDDEN)), "fc2_b": jnp.zeros((HIDDEN,), jnp.float32),
            "ls2": jnp.ones((HIDDEN,), jnp.float32),
        })
    return params


def pack_params(params, batch):
    """One-time host-side packing of all weight stacks / constants (outside the jitted step)."""
    L = params["layers"]

    def stack(fn, dtype=jnp.float32):
        return jnp.stack([fn(lp) for lp in L], axis=0).astype(dtype)

    patch_w = params["patch_w"].reshape(HIDDEN, CPP).T.astype(MXU_DTYPE)             # [CPP, D]
    # row 0: cls + pos[0]; rows 1..SEQ-1: conv bias + pos[1:]; padded rows: 0
    add_seq = jnp.concatenate(
        [params["cls_token"][0] + params["pos_embed"][0, :1],
         params["patch_b"][None, :] + params["pos_embed"][0, 1:],
         jnp.zeros((SEQ_PAD - SEQ, HIDDEN), jnp.float32)], axis=0)                    # [SEQ_PAD, D]
    add_full = jnp.tile(add_seq, (batch, 1))                                          # [B*SEQ_PAD, D]

    # additive attention mask: valid iff same (head, batch) block AND key position < SEQ
    n = batch * HEADS * SEQ_PAD
    idx = jnp.arange(n)
    same_block = (idx[:, None] // SEQ_PAD) == (idx[None, :] // SEQ_PAD)
    key_valid = (idx[None, :] % SEQ_PAD) < SEQ
    attn_bias = jnp.where(same_block & key_valid, 0.0, -1e30).astype(jnp.float32)     # [n, n]

    coral_b = jnp.zeros((1, NUM_LOGITS_PAD), jnp.float32).at[0, :NUM_LOGITS].set(params["coral_b"])

    return {
        "patch_w": patch_w,
        "add_full": add_full,
        "attn_bias": attn_bias,
        "ln1_w": stack(lambda lp: lp["ln1_w"].reshape(1, HIDDEN)),
        "ln1_b": stack(lambda lp: lp["ln1_b"].reshape(1, HIDDEN)),
        "qkv_w": stack(lambda lp: jnp.concatenate([lp["q_w"], lp["k_w"], lp["v_w"]], axis=1),
                       MXU_DTYPE),
        "qkv_b": stack(lambda lp: jnp.concatenate([lp["q_b"], lp["k_b"], lp["v_b"]]).reshape(1, 3 * HIDDEN)),
        "o_w": stack(lambda lp: lp["o_w"], MXU_DTYPE),
        "o_b": stack(lambda lp: lp["o_b"].reshape(1, HIDDEN)),
        "ls1": stack(lambda lp: lp["ls1"].reshape(1, HIDDEN)),
        "ln2_w": stack(lambda lp: lp["ln2_w"].reshape(1, HIDDEN)),
        "ln2_b": stack(lambda lp: lp["ln2_b"].reshape(1, HIDDEN)),
        "fc1_w": stack(lambda lp: lp["fc1_w"], MXU_DTYPE),
        "fc1_b": stack(lambda lp: lp["fc1_b"].reshape(1, MLP)),
        "fc2_w": stack(lambda lp: lp["fc2_w"], MXU_DTYPE),
        "fc2_b": stack(lambda lp: lp["fc2_b"].reshape(1, HIDDEN)),
        "ls2": stack(lambda lp: lp["ls2"].reshape(1, HIDDEN)),
        "fln_w": params["final_ln_w"].reshape(1, HIDDEN),
        "fln_b": params["final_ln_b"].reshape(1, HIDDEN),
        "coral_w": params["coral_w"].reshape(1, HIDDEN),
        "coral_b": coral_b,
    }


# --------------------------------- forward -----------------------------------
def dinov2_coral_forward(packed, pixel_values, labels=None):
    """pixel_values: NCHW float32 [B, 3, IMG, IMG]; labels: int32 [B] (optional)."""
    Bn = pixel_values.shape[0]

    # stride-P conv == per-patch matmul: extract patch rows; row 0 per sample is the CLS slot,
    # rows SEQ..SEQ_PAD-1 are zero padding (masked inside the kernel's attention bias).
    x = pixel_values.reshape(Bn, CHANNELS, IMG // PATCH, PATCH, IMG // PATCH, PATCH)
    x = x.transpose(0, 2, 4, 1, 3, 5).reshape(Bn, NUM_PATCHES, CPP)
    patches = jnp.concatenate(
        [jnp.zeros((Bn, 1, CPP), jnp.float32), x,
         jnp.zeros((Bn, SEQ_PAD - SEQ, CPP), jnp.float32)], axis=1)
    patches = patches.reshape(Bn * SEQ_PAD, CPP).astype(MXU_DTYPE)                    # [B*SEQ_PAD, CPP]

    inputs = [patches, packed["patch_w"], packed["add_full"], packed["attn_bias"],
              packed["ln1_w"], packed["ln1_b"], packed["qkv_w"], packed["qkv_b"],
              packed["o_w"], packed["o_b"], packed["ls1"],
              packed["ln2_w"], packed["ln2_b"], packed["fc1_w"], packed["fc1_b"],
              packed["fc2_w"], packed["fc2_b"], packed["ls2"],
              packed["fln_w"], packed["fln_b"], packed["coral_w"], packed["coral_b"]]
    in_specs = [pl.BlockSpec(memory_space=VMEM)] * len(inputs)

    with_loss = labels is not None
    if with_loss:
        inputs.append(labels.astype(jnp.int32).reshape(Bn, 1))
        in_specs.append(pl.BlockSpec(memory_space=VMEM))
        out_shape = (jax.ShapeDtypeStruct((Bn, NUM_LOGITS_PAD), jnp.float32),
                     jax.ShapeDtypeStruct((1, 1), jnp.float32))
        out_specs = (pl.BlockSpec(memory_space=VMEM), pl.BlockSpec(memory_space=VMEM))
    else:
        out_shape = jax.ShapeDtypeStruct((Bn, NUM_LOGITS_PAD), jnp.float32)
        out_specs = pl.BlockSpec(memory_space=VMEM)

    outs = pl.pallas_call(
        partial(_fused_forward_kernel, batch=Bn, with_loss=with_loss),
        out_shape=out_shape,
        in_specs=in_specs,
        out_specs=out_specs,
    )(*inputs)

    if with_loss:
        logits_pad, loss = outs
        return {"logits": logits_pad[:, :NUM_LOGITS], "loss": loss[0, 0]}
    return {"logits": outs[:, :NUM_LOGITS]}


# ----------------------------------- main -------------------------------------
if __name__ == "__main__":
    key = jax.random.PRNGKey(0)
    k_params, k_pix, k_lab = jax.random.split(key, 3)

    params = init_params(k_params)
    packed = pack_params(params, batch=B)     # pre-pack once, outside the jitted step

    pixel_values = jax.random.normal(k_pix, (B, CHANNELS, IMG, IMG), jnp.float32)   # NCHW
    labels = jax.random.randint(k_lab, (B,), 0, NUM_CLASSES, jnp.int32)

    fwd = jax.jit(dinov2_coral_forward)
    out = fwd(packed, pixel_values, labels)
    logits = jax.block_until_ready(out["logits"])
    loss = jax.block_until_ready(out["loss"])

    assert logits.shape == (B, NUM_CLASSES - 1), logits.shape
    assert loss.shape == (), loss.shape
    assert bool(jnp.isfinite(loss)) and bool(jnp.all(jnp.isfinite(logits)))
    print("KERNEL_OK")
</pallas_src>

<mosaic_0001>
module attributes {stable_mosaic.version = 11 : i64} {
  func.func @_fused_forward_kernel(%arg0: memref<16x192xbf16, #tpu.memory_space<vmem>>, %arg1: memref<192x32xbf16, #tpu.memory_space<vmem>>, %arg2: memref<16x32xf32, #tpu.memory_space<vmem>>, %arg3: memref<64x64xf32, #tpu.memory_space<vmem>>, %arg4: memref<2x1x32xf32, #tpu.memory_space<vmem>>, %arg5: memref<2x1x32xf32, #tpu.memory_space<vmem>>, %arg6: memref<2x32x96xbf16, #tpu.memory_space<vmem>>, %arg7: memref<2x1x96xf32, #tpu.memory_space<vmem>>, %arg8: memref<2x32x32xbf16, #tpu.memory_space<vmem>>, %arg9: memref<2x1x32xf32, #tpu.memory_space<vmem>>, %arg10: memref<2x1x32xf32, #tpu.memory_space<vmem>>, %arg11: memref<2x1x32xf32, #tpu.memory_space<vmem>>, %arg12: memref<2x1x32xf32, #tpu.memory_space<vmem>>, %arg13: memref<2x32x128xbf16, #tpu.memory_space<vmem>>, %arg14: memref<2x1x128xf32, #tpu.memory_space<vmem>>, %arg15: memref<2x128x32xbf16, #tpu.memory_space<vmem>>, %arg16: memref<2x1x32xf32, #tpu.memory_space<vmem>>, %arg17: memref<2x1x32xf32, #tpu.memory_space<vmem>>, %arg18: memref<1x32xf32, #tpu.memory_space<vmem>>, %arg19: memref<1x32xf32, #tpu.memory_space<vmem>>, %arg20: memref<1x32xf32, #tpu.memory_space<vmem>>, %arg21: memref<1x384xf32, #tpu.memory_space<vmem>>, %arg22: memref<2x1xi32, #tpu.memory_space<vmem>>, %arg23: memref<2x384xf32, #tpu.memory_space<vmem>>, %arg24: memref<1x1xf32, #tpu.memory_space<vmem>>) attributes {dimension_semantics = [], scalar_prefetch = 0 : i64, scratch_operands = 0 : i64, tpu.core_type = #tpu.core_type<tc>} {
    %c0 = arith.constant 0 : index
    %c0_0 = arith.constant 0 : index
    %0 = vector.load %arg0[%c0, %c0_0] : memref<16x192xbf16, #tpu.memory_space<vmem>>, vector<16x192xbf16>
    %c0_1 = arith.constant 0 : index
    %c0_2 = arith.constant 0 : index
    %1 = vector.load %arg1[%c0_1, %c0_2] : memref<192x32xbf16, #tpu.memory_space<vmem>>, vector<192x32xbf16>
    %cst = arith.constant dense<0.000000e+00> : vector<16x32xf32>
    %2 = tpu.matmul %0, %1, %cst {dimension_numbers = #tpu.dot_dimension_numbers<[1], [0], [0], [1], [0, 0, 1, 1], [], []>} : vector<16x192xbf16>, vector<192x32xbf16>, vector<16x32xf32> -> vector<16x32xf32>
    %c0_3 = arith.constant 0 : index
    %c0_4 = arith.constant 0 : index
    %3 = vector.load %arg2[%c0_3, %c0_4] : memref<16x32xf32, #tpu.memory_space<vmem>>, vector<16x32xf32>
    %4 = arith.addf %2, %3 : vector<16x32xf32>
    %c0_5 = arith.constant 0 : index
    %c0_6 = arith.constant 0 : index
    %5 = vector.load %arg3[%c0_5, %c0_6] : memref<64x64xf32, #tpu.memory_space<vmem>>, vector<64x64xf32>
    %c0_7 = arith.constant 0 : index
    %c0_8 = arith.constant 0 : index
    %c0_9 = arith.constant 0 : index
    %6 = vector.load %arg4[%c0_7, %c0_8, %c0_9] : memref<2x1x32xf32, #tpu.memory_space<vmem>>, vector<1x1x32xf32>
    %7 = vector.shape_cast %6 : vector<1x1x32xf32> to vector<1x32xf32>
    %c0_10 = arith.constant 0 : index
    %c0_11 = arith.constant 0 : index
    %c0_12 = arith.constant 0 : index
    %8 = vector.load %arg5[%c0_10, %c0_11, %c0_12] : memref<2x1x32xf32, #tpu.memory_space<vmem>>, vector<1x1x32xf32>
    %9 = vector.shape_cast %8 : vector<1x1x32xf32> to vector<1x32xf32>
    %cst_13 = arith.constant dense<0.000000e+00> : vector<16xf32>
    %10 = vector.multi_reduction <add>, %4, %cst_13 [1] : vector<16x32xf32> to vector<16xf32>
    %11 = vector.shape_cast %10 : vector<16xf32> to vector<16x1xf32>
    %cst_14 = arith.constant 3.200000e+01 : f32
    %12 = vector.broadcast %cst_14 : f32 to vector<16x1xf32>
    %13 = arith.divf %11, %12 : vector<16x1xf32>
    %14 = vector.broadcast %13 : vector<16x1xf32> to vector<16x32xf32>
    %15 = arith.subf %4, %14 : vector<16x32xf32>
    %16 = arith.mulf %15, %15 : vector<16x32xf32>
    %cst_15 = arith.constant dense<0.000000e+00> : vector<16xf32>
    %17 = vector.multi_reduction <add>, %16, %cst_15 [1] : vector<16x32xf32> to vector<16xf32>
    %18 = vector.shape_cast %17 : vector<16xf32> to vector<16x1xf32>
    %cst_16 = arith.constant 3.200000e+01 : f32
    %19 = vector.broadcast %cst_16 : f32 to vector<16x1xf32>
    %20 = arith.divf %18, %19 : vector<16x1xf32>
    %cst_17 = arith.constant 9.99999997E-7 : f32
    %21 = vector.broadcast %cst_17 : f32 to vector<16x1xf32>
    %22 = arith.addf %20, %21 : vector<16x1xf32>
    %23 = math.rsqrt %22 : vector<16x1xf32>
    %24 = vector.broadcast %23 : vector<16x1xf32> to vector<16x32xf32>
    %25 = arith.mulf %15, %24 : vector<16x32xf32>
    %26 = vector.broadcast %7 : vector<1x32xf32> to vector<16x32xf32>
    %27 = arith.mulf %25, %26 : vector<16x32xf32>
    %28 = vector.broadcast %9 : vector<1x32xf32> to vector<16x32xf32>
    %29 = arith.addf %27, %28 : vector<16x32xf32>
    %30 = arith.truncf %29 : vector<16x32xf32> to vector<16x32xbf16>
    %c0_18 = arith.constant 0 : index
    %c0_19 = arith.constant 0 : index
    %c0_20 = arith.constant 0 : index
    %31 = vector.load %arg6[%c0_18, %c0_19, %c0_20] : memref<2x32x96xbf16, #tpu.memory_space<vmem>>, vector<1x32x96xbf16>
    %32 = vector.shape_cast %31 : vector<1x32x96xbf16> to vector<32x96xbf16>
    %cst_21 = arith.constant dense<0.000000e+00> : vector<16x96xf32>
    %33 = tpu.matmul %30, %32, %cst_21 {dimension_numbers = #tpu.dot_dimension_numbers<[1], [0], [0], [1], [0, 0, 1, 1], [], []>} : vector<16x32xbf16>, vector<32x96xbf16>, vector<16x96xf32> -> vector<16x96xf32>
    %c0_22 = arith.constant 0 : index
    %c0_23 = arith.constant 0 : index
    %c0_24 = arith.constant 0 : index
    %34 = vector.load %arg7[%c0_22, %c0_23, %c0_24] : memref<2x1x96xf32, #tpu.memory_space<vmem>>, vector<1x1x96xf32>
    %35 = vector.shape_cast %34 : vector<1x1x96xf32> to vector<1x96xf32>
    %36 = vector.broadcast %35 : vector<1x96xf32> to vector<16x96xf32>
    %37 = arith.addf %33, %36 : vector<16x96xf32>
    %38 = arith.truncf %37 : vector<16x96xf32> to vector<16x96xbf16>
    %39 = vector.extract_strided_slice %38 {offsets = [0, 0], sizes = [16, 8], strides = [1, 1]} : vector<16x96xbf16> to vector<16x8xbf16>
    %40 = vector.extract_strided_slice %38 {offsets = [0, 8], sizes = [16, 8], strides = [1, 1]} : vector<16x96xbf16> to vector<16x8xbf16>
    %41 = vector.extract_strided_slice %38 {offsets = [0, 16], sizes = [16, 8], strides = [1, 1]} : vector<16x96xbf16> to vector<16x8xbf16>
    %42 = vector.extract_strided_slice %38 {offsets = [0, 24], sizes = [16, 8], strides = [1, 1]} : vector<16x96xbf16> to vector<16x8xbf16>
    %43 = tpu.concatenate %39, %40, %41, %42 in 0 : vector<16x8xbf16>, vector<16x8xbf16>, vector<16x8xbf16>, vector<16x8xbf16> -> vector<64x8xbf16>
    %44 = vector.extract_strided_slice %38 {offsets = [0, 32], sizes = [16, 8], strides = [1, 1]} : vector<16x96xbf16> to vector<16x8xbf16>
    %45 = vector.extract_strided_slice %38 {offsets = [0, 40], sizes = [16, 8], strides = [1, 1]} : vector<16x96xbf16> to vector<16x8xbf16>
    %46 = vector.extract_strided_slice %38 {offsets = [0, 48], sizes = [16, 8], strides = [1, 1]} : vector<16x96xbf16> to vector<16x8xbf16>
    %47 = vector.extract_strided_slice %38 {offsets = [0, 56], sizes = [16, 8], strides = [1, 1]} : vector<16x96xbf16> to vector<16x8xbf16>
    %48 = tpu.concatenate %44, %45, %46, %47 in 0 : vector<16x8xbf16>, vector<16x8xbf16>, vector<16x8xbf16>, vector<16x8xbf16> -> vector<64x8xbf16>
    %49 = vector.extract_strided_slice %38 {offsets = [0, 64], sizes = [16, 8], strides = [1, 1]} : vector<16x96xbf16> to vector<16x8xbf16>
    %50 = vector.extract_strided_slice %38 {offsets = [0, 72], sizes = [16, 8], strides = [1, 1]} : vector<16x96xbf16> to vector<16x8xbf16>
    %51 = vector.extract_strided_slice %38 {offsets = [0, 80], sizes = [16, 8], strides = [1, 1]} : vector<16x96xbf16> to vector<16x8xbf16>
    %52 = vector.extract_strided_slice %38 {offsets = [0, 88], sizes = [16, 8], strides = [1, 1]} : vector<16x96xbf16> to vector<16x8xbf16>
    %53 = tpu.concatenate %49, %50, %51, %52 in 0 : vector<16x8xbf16>, vector<16x8xbf16>, vector<16x8xbf16>, vector<16x8xbf16> -> vector<64x8xbf16>
    %cst_25 = arith.constant dense<0.000000e+00> : vector<64x64xf32>
    %54 = tpu.matmul %43, %48, %cst_25 {dimension_numbers = #tpu.dot_dimension_numbers<[1], [1], [0], [0], [0, 0, 1, 0], [], []>} : vector<64x8xbf16>, vector<64x8xbf16>, vector<64x64xf32> -> vector<64x64xf32>
    %cst_26 = arith.constant 0.353553385 : f32
    %55 = vector.broadcast %cst_26 : f32 to vector<64x64xf32>
    %56 = arith.mulf %54, %55 : vector<64x64xf32>
    %57 = arith.addf %56, %5 : vector<64x64xf32>
    %cst_27 = arith.constant dense<0xFF800000> : vector<64xf32>
    %58 = vector.multi_reduction <maximumf>, %57, %cst_27 [1] : vector<64x64xf32> to vector<64xf32>
    %59 = vector.shape_cast %58 : vector<64xf32> to vector<64x1xf32>
    %60 = vector.broadcast %59 : vector<64x1xf32> to vector<64x64xf32>
    %61 = arith.subf %57, %60 : vector<64x64xf32>
    %62 = math.exp %61 : vector<64x64xf32>
    %cst_28 = arith.constant dense<0.000000e+00> : vector<64xf32>
    %63 = vector.multi_reduction <add>, %62, %cst_28 [1] : vector<64x64xf32> to vector<64xf32>
    %64 = vector.shape_cast %63 : vector<64xf32> to vector<64x1xf32>
    %65 = tpu.reciprocal %64 {approx = true} : vector<64x1xf32> -> vector<64x1xf32>
    %66 = vector.broadcast %65 : vector<64x1xf32> to vector<64x64xf32>
    %67 = arith.mulf %62, %66 : vector<64x64xf32>
    %68 = arith.truncf %67 : vector<64x64xf32> to vector<64x64xbf16>
    %cst_29 = arith.constant dense<0.000000e+00> : vector<64x8xf32>
    %69 = tpu.matmul %68, %53, %cst_29 {dimension_numbers = #tpu.dot_dimension_numbers<[1], [0], [0], [1], [0, 0, 1, 1], [], []>} : vector<64x64xbf16>, vector<64x8xbf16>, vector<64x8xf32> -> vector<64x8xf32>
    %70 = vector.extract_strided_slice %69 {offsets = [0, 0], sizes = [16, 8], strides = [1, 1]} : vector<64x8xf32> to vector<16x8xf32>
    %71 = vector.extract_strided_slice %69 {offsets = [16, 0], sizes = [16, 8], strides = [1, 1]} : vector<64x8xf32> to vector<16x8xf32>
    %72 = vector.extract_strided_slice %69 {offsets = [32, 0], sizes = [16, 8], strides = [1, 1]} : vector<64x8xf32> to vector<16x8xf32>
    %73 = vector.extract_strided_slice %69 {offsets = [48, 0], sizes = [16, 8], strides = [1, 1]} : vector<64x8xf32> to vector<16x8xf32>
    %74 = tpu.concatenate %70, %71, %72, %73 in 1 : vector<16x8xf32>, vector<16x8xf32>, vector<16x8xf32>, vector<16x8xf32> -> vector<16x32xf32>
    %75 = arith.truncf %74 : vector<16x32xf32> to vector<16x32xbf16>
    %c0_30 = arith.constant 0 : index
    %c0_31 = arith.constant 0 : index
    %c0_32 = arith.constant 0 : index
    %76 = vector.load %arg8[%c0_30, %c0_31, %c0_32] : memref<2x32x32xbf16, #tpu.memory_space<vmem>>, vector<1x32x32xbf16>
    %77 = vector.shape_cast %76 : vector<1x32x32xbf16> to vector<32x32xbf16>
    %cst_33 = arith.constant dense<0.000000e+00> : vector<16x32xf32>
    %78 = tpu.matmul %75, %77, %cst_33 {dimension_numbers = #tpu.dot_dimension_numbers<[1], [0], [0], [1], [0, 0, 1, 1], [], []>} : vector<16x32xbf16>, vector<32x32xbf16>, vector<16x32xf32> -> vector<16x32xf32>
    %c0_34 = arith.constant 0 : index
    %c0_35 = arith.constant 0 : index
    %c0_36 = arith.constant 0 : index
    %79 = vector.load %arg9[%c0_34, %c0_35, %c0_36] : memref<2x1x32xf32, #tpu.memory_space<vmem>>, vector<1x1x32xf32>
    %80 = vector.shape_cast %79 : vector<1x1x32xf32> to vector<1x32xf32>
    %81 = vector.broadcast %80 : vector<1x32xf32> to vector<16x32xf32>
    %82 = arith.addf %78, %81 : vector<16x32xf32>
    %c0_37 = arith.constant 0 : index
    %c0_38 = arith.constant 0 : index
    %c0_39 = arith.constant 0 : index
    %83 = vector.load %arg10[%c0_37, %c0_38, %c0_39] : memref<2x1x32xf32, #tpu.memory_space<vmem>>, vector<1x1x32xf32>
    %84 = vector.shape_cast %83 : vector<1x1x32xf32> to vector<1x32xf32>
    %85 = vector.broadcast %84 : vector<1x32xf32> to vector<16x32xf32>
    %86 = arith.mulf %82, %85 : vector<16x32xf32>
    %87 = arith.addf %4, %86 : vector<16x32xf32>
    %c0_40 = arith.constant 0 : index
    %c0_41 = arith.constant 0 : index
    %c0_42 = arith.constant 0 : index
    %88 = vector.load %arg11[%c0_40, %c0_41, %c0_42] : memref<2x1x32xf32, #tpu.memory_space<vmem>>, vector<1x1x32xf32>
    %89 = vector.shape_cast %88 : vector<1x1x32xf32> to vector<1x32xf32>
    %c0_43 = arith.constant 0 : index
    %c0_44 = arith.constant 0 : index
    %c0_45 = arith.constant 0 : index
    %90 = vector.load %arg12[%c0_43, %c0_44, %c0_45] : memref<2x1x32xf32, #tpu.memory_space<vmem>>, vector<1x1x32xf32>
    %91 = vector.shape_cast %90 : vector<1x1x32xf32> to vector<1x32xf32>
    %cst_46 = arith.constant dense<0.000000e+00> : vector<16xf32>
    %92 = vector.multi_reduction <add>, %87, %cst_46 [1] : vector<16x32xf32> to vector<16xf32>
    %93 = vector.shape_cast %92 : vector<16xf32> to vector<16x1xf32>
    %cst_47 = arith.constant 3.200000e+01 : f32
    %94 = vector.broadcast %cst_47 : f32 to vector<16x1xf32>
    %95 = arith.divf %93, %94 : vector<16x1xf32>
    %96 = vector.broadcast %95 : vector<16x1xf32> to vector<16x32xf32>
    %97 = arith.subf %87, %96 : vector<16x32xf32>
    %98 = arith.mulf %97, %97 : vector<16x32xf32>
    %cst_48 = arith.constant dense<0.000000e+00> : vector<16xf32>
    %99 = vector.multi_reduction <add>, %98, %cst_48 [1] : vector<16x32xf32> to vector<16xf32>
    %100 = vector.shape_cast %99 : vector<16xf32> to vector<16x1xf32>
    %cst_49 = arith.constant 3.200000e+01 : f32
    %101 = vector.broadcast %cst_49 : f32 to vector<16x1xf32>
    %102 = arith.divf %100, %101 : vector<16x1xf32>
    %cst_50 = arith.constant 9.99999997E-7 : f32
    %103 = vector.broadcast %cst_50 : f32 to vector<16x1xf32>
    %104 = arith.addf %102, %103 : vector<16x1xf32>
    %105 = math.rsqrt %104 : vector<16x1xf32>
    %106 = vector.broadcast %105 : vector<16x1xf32> to vector<16x32xf32>
    %107 = arith.mulf %97, %106 : vector<16x32xf32>
    %108 = vector.broadcast %89 : vector<1x32xf32> to vector<16x32xf32>
    %109 = arith.mulf %107, %108 : vector<16x32xf32>
    %110 = vector.broadcast %91 : vector<1x32xf32> to vector<16x32xf32>
    %111 = arith.addf %109, %110 : vector<16x32xf32>
    %112 = arith.truncf %111 : vector<16x32xf32> to vector<16x32xbf16>
    %c0_51 = arith.constant 0 : index
    %c0_52 = arith.constant 0 : index
    %c0_53 = arith.constant 0 : index
    %113 = vector.load %arg13[%c0_51, %c0_52, %c0_53] : memref<2x32x128xbf16, #tpu.memory_space<vmem>>, vector<1x32x128xbf16>
    %114 = vector.shape_cast %113 : vector<1x32x128xbf16> to vector<32x128xbf16>
    %cst_54 = arith.constant dense<0.000000e+00> : vector<16x128xf32>
    %115 = tpu.matmul %112, %114, %cst_54 {dimension_numbers = #tpu.dot_dimension_numbers<[1], [0], [0], [1], [0, 0, 1, 1], [], []>} : vector<16x32xbf16>, vector<32x128xbf16>, vector<16x128xf32> -> vector<16x128xf32>
    %c0_55 = arith.constant 0 : index
    %c0_56 = arith.constant 0 : index
    %c0_57 = arith.constant 0 : index
    %116 = vector.load %arg14[%c0_55, %c0_56, %c0_57] : memref<2x1x128xf32, #tpu.memory_space<vmem>>, vector<1x1x128xf32>
    %117 = vector.shape_cast %116 : vector<1x1x128xf32> to vector<1x128xf32>
    %118 = vector.broadcast %117 : vector<1x128xf32> to vector<16x128xf32>
    %119 = arith.addf %115, %118 : vector<16x128xf32>
    %120 = arith.mulf %119, %119 : vector<16x128xf32>
    %121 = arith.mulf %119, %120 : vector<16x128xf32>
    %cst_58 = arith.constant 4.471500e-02 : f32
    %122 = vector.broadcast %cst_58 : f32 to vector<16x128xf32>
    %123 = arith.mulf %122, %121 : vector<16x128xf32>
    %124 = arith.addf %119, %123 : vector<16x128xf32>
    %cst_59 = arith.constant 0.797884583 : f32
    %125 = vector.broadcast %cst_59 : f32 to vector<16x128xf32>
    %126 = arith.mulf %125, %124 : vector<16x128xf32>
    %127 = math.tanh %126 : vector<16x128xf32>
    %cst_60 = arith.constant 1.000000e+00 : f32
    %128 = vector.broadcast %cst_60 : f32 to vector<16x128xf32>
    %129 = arith.addf %128, %127 : vector<16x128xf32>
    %cst_61 = arith.constant 5.000000e-01 : f32
    %130 = vector.broadcast %cst_61 : f32 to vector<16x128xf32>
    %131 = arith.mulf %130, %129 : vector<16x128xf32>
    %132 = arith.mulf %119, %131 : vector<16x128xf32>
    %133 = arith.truncf %132 : vector<16x128xf32> to vector<16x128xbf16>
    %c0_62 = arith.constant 0 : index
    %c0_63 = arith.constant 0 : index
    %c0_64 = arith.constant 0 : index
    %134 = vector.load %arg15[%c0_62, %c0_63, %c0_64] : memref<2x128x32xbf16, #tpu.memory_space<vmem>>, vector<1x128x32xbf16>
    %135 = vector.shape_cast %134 : vector<1x128x32xbf16> to vector<128x32xbf16>
    %cst_65 = arith.constant dense<0.000000e+00> : vector<16x32xf32>
    %136 = tpu.matmul %133, %135, %cst_65 {dimension_numbers = #tpu.dot_dimension_numbers<[1], [0], [0], [1], [0, 0, 1, 1], [], []>} : vector<16x128xbf16>, vector<128x32xbf16>, vector<16x32xf32> -> vector<16x32xf32>
    %c0_66 = arith.constant 0 : index
    %c0_67 = arith.constant 0 : index
    %c0_68 = arith.constant 0 : index
    %137 = vector.load %arg16[%c0_66, %c0_67, %c0_68] : memref<2x1x32xf32, #tpu.memory_space<vmem>>, vector<1x1x32xf32>
    %138 = vector.shape_cast %137 : vector<1x1x32xf32> to vector<1x32xf32>
    %139 = vector.broadcast %138 : vector<1x32xf32> to vector<16x32xf32>
    %140 = arith.addf %136, %139 : vector<16x32xf32>
    %c0_69 = arith.constant 0 : index
    %c0_70 = arith.constant 0 : index
    %c0_71 = arith.constant 0 : index
    %141 = vector.load %arg17[%c0_69, %c0_70, %c0_71] : memref<2x1x32xf32, #tpu.memory_space<vmem>>, vector<1x1x32xf32>
    %142 = vector.shape_cast %141 : vector<1x1x32xf32> to vector<1x32xf32>
    %143 = vector.broadcast %142 : vector<1x32xf32> to vector<16x32xf32>
    %144 = arith.mulf %140, %143 : vector<16x32xf32>
    %145 = arith.addf %87, %144 : vector<16x32xf32>
    %c1 = arith.constant 1 : index
    %c0_72 = arith.constant 0 : index
    %c0_73 = arith.constant 0 : index
    %146 = vector.load %arg4[%c1, %c0_72, %c0_73] : memref<2x1x32xf32, #tpu.memory_space<vmem>>, vector<1x1x32xf32>
    %147 = vector.shape_cast %146 : vector<1x1x32xf32> to vector<1x32xf32>
    %c1_74 = arith.constant 1 : index
    %c0_75 = arith.constant 0 : index
    %c0_76 = arith.constant 0 : index
    %148 = vector.load %arg5[%c1_74, %c0_75, %c0_76] : memref<2x1x32xf32, #tpu.memory_space<vmem>>, vector<1x1x32xf32>
    %149 = vector.shape_cast %148 : vector<1x1x32xf32> to vector<1x32xf32>
    %cst_77 = arith.constant dense<0.000000e+00> : vector<16xf32>
    %150 = vector.multi_reduction <add>, %145, %cst_77 [1] : vector<16x32xf32> to vector<16xf32>
    %151 = vector.shape_cast %150 : vector<16xf32> to vector<16x1xf32>
    %cst_78 = arith.constant 3.200000e+01 : f32
    %152 = vector.broadcast %cst_78 : f32 to vector<16x1xf32>
    %153 = arith.divf %151, %152 : vector<16x1xf32>
    %154 = vector.broadcast %153 : vector<16x1xf32> to vector<16x32xf32>
    %155 = arith.subf %145, %154 : vector<16x32xf32>
    %156 = arith.mulf %155, %155 : vector<16x32xf32>
    %cst_79 = arith.constant dense<0.000000e+00> : vector<16xf32>
    %157 = vector.multi_reduction <add>, %156, %cst_79 [1] : vector<16x32xf32> to vector<16xf32>
    %158 = vector.shape_cast %157 : vector<16xf32> to vector<16x1xf32>
    %cst_80 = arith.constant 3.200000e+01 : f32
    %159 = vector.broadcast %cst_80 : f32 to vector<16x1xf32>
    %160 = arith.divf %158, %159 : vector<16x1xf32>
    %cst_81 = arith.constant 9.99999997E-7 : f32
    %161 = vector.broadcast %cst_81 : f32 to vector<16x1xf32>
    %162 = arith.addf %160, %161 : vector<16x1xf32>
    %163 = math.rsqrt %162 : vector<16x1xf32>
    %164 = vector.broadcast %163 : vector<16x1xf32> to vector<16x32xf32>
    %165 = arith.mulf %155, %164 : vector<16x32xf32>
    %166 = vector.broadcast %147 : vector<1x32xf32> to vector<16x32xf32>
    %167 = arith.mulf %165, %166 : vector<16x32xf32>
    %168 = vector.broadcast %149 : vector<1x32xf32> to vector<16x32xf32>
    %169 = arith.addf %167, %168 : vector<16x32xf32>
    %170 = arith.truncf %169 : vector<16x32xf32> to vector<16x32xbf16>
    %c1_82 = arith.constant 1 : index
    %c0_83 = arith.constant 0 : index
    %c0_84 = arith.constant 0 : index
    %171 = vector.load %arg6[%c1_82, %c0_83, %c0_84] : memref<2x32x96xbf16, #tpu.memory_space<vmem>>, vector<1x32x96xbf16>
    %172 = vector.shape_cast %171 : vector<1x32x96xbf16> to vector<32x96xbf16>
    %cst_85 = arith.constant dense<0.000000e+00> : vector<16x96xf32>
    %173 = tpu.matmul %170, %172, %cst_85 {dimension_numbers = #tpu.dot_dimension_numbers<[1], [0], [0], [1], [0, 0, 1, 1], [], []>} : vector<16x32xbf16>, vector<32x96xbf16>, vector<16x96xf32> -> vector<16x96xf32>
    %c1_86 = arith.constant 1 : index
    %c0_87 = arith.constant 0 : index
    %c0_88 = arith.constant 0 : index
    %174 = vector.load %arg7[%c1_86, %c0_87, %c0_88] : memref<2x1x96xf32, #tpu.memory_space<vmem>>, vector<1x1x96xf32>
    %175 = vector.shape_cast %174 : vector<1x1x96xf32> to vector<1x96xf32>
    %176 = vector.broadcast %175 : vector<1x96xf32> to vector<16x96xf32>
    %177 = arith.addf %173, %176 : vector<16x96xf32>
    %178 = arith.truncf %177 : vector<16x96xf32> to vector<16x96xbf16>
    %179 = vector.extract_strided_slice %178 {offsets = [0, 0], sizes = [16, 8], strides = [1, 1]} : vector<16x96xbf16> to vector<16x8xbf16>
    %180 = vector.extract_strided_slice %178 {offsets = [0, 8], sizes = [16, 8], strides = [1, 1]} : vector<16x96xbf16> to vector<16x8xbf16>
    %181 = vector.extract_strided_slice %178 {offsets = [0, 16], sizes = [16, 8], strides = [1, 1]} : vector<16x96xbf16> to vector<16x8xbf16>
    %182 = vector.extract_strided_slice %178 {offsets = [0, 24], sizes = [16, 8], strides = [1, 1]} : vector<16x96xbf16> to vector<16x8xbf16>
    %183 = tpu.concatenate %179, %180, %181, %182 in 0 : vector<16x8xbf16>, vector<16x8xbf16>, vector<16x8xbf16>, vector<16x8xbf16> -> vector<64x8xbf16>
    %184 = vector.extract_strided_slice %178 {offsets = [0, 32], sizes = [16, 8], strides = [1, 1]} : vector<16x96xbf16> to vector<16x8xbf16>
    %185 = vector.extract_strided_slice %178 {offsets = [0, 40], sizes = [16, 8], strides = [1, 1]} : vector<16x96xbf16> to vector<16x8xbf16>
    %186 = vector.extract_strided_slice %178 {offsets = [0, 48], sizes = [16, 8], strides = [1, 1]} : vector<16x96xbf16> to vector<16x8xbf16>
    %187 = vector.extract_strided_slice %178 {offsets = [0, 56], sizes = [16, 8], strides = [1, 1]} : vector<16x96xbf16> to vector<16x8xbf16>
    %188 = tpu.concatenate %184, %185, %186, %187 in 0 : vector<16x8xbf16>, vector<16x8xbf16>, vector<16x8xbf16>, vector<16x8xbf16> -> vector<64x8xbf16>
    %189 = vector.extract_strided_slice %178 {offsets = [0, 64], sizes = [16, 8], strides = [1, 1]} : vector<16x96xbf16> to vector<16x8xbf16>
    %190 = vector.extract_strided_slice %178 {offsets = [0, 72], sizes = [16, 8], strides = [1, 1]} : vector<16x96xbf16> to vector<16x8xbf16>
    %191 = vector.extract_strided_slice %178 {offsets = [0, 80], sizes = [16, 8], strides = [1, 1]} : vector<16x96xbf16> to vector<16x8xbf16>
    %192 = vector.extract_strided_slice %178 {offsets = [0, 88], sizes = [16, 8], strides = [1, 1]} : vector<16x96xbf16> to vector<16x8xbf16>
    %193 = tpu.concatenate %189, %190, %191, %192 in 0 : vector<16x8xbf16>, vector<16x8xbf16>, vector<16x8xbf16>, vector<16x8xbf16> -> vector<64x8xbf16>
    %cst_89 = arith.constant dense<0.000000e+00> : vector<64x64xf32>
    %194 = tpu.matmul %183, %188, %cst_89 {dimension_numbers = #tpu.dot_dimension_numbers<[1], [1], [0], [0], [0, 0, 1, 0], [], []>} : vector<64x8xbf16>, vector<64x8xbf16>, vector<64x64xf32> -> vector<64x64xf32>
    %cst_90 = arith.constant 0.353553385 : f32
    %195 = vector.broadcast %cst_90 : f32 to vector<64x64xf32>
    %196 = arith.mulf %194, %195 : vector<64x64xf32>
    %197 = arith.addf %196, %5 : vector<64x64xf32>
    %cst_91 = arith.constant dense<0xFF800000> : vector<64xf32>
    %198 = vector.multi_reduction <maximumf>, %197, %cst_91 [1] : vector<64x64xf32> to vector<64xf32>
    %199 = vector.shape_cast %198 : vector<64xf32> to vector<64x1xf32>
    %200 = vector.broadcast %199 : vector<64x1xf32> to vector<64x64xf32>
    %201 = arith.subf %197, %200 : vector<64x64xf32>
    %202 = math.exp %201 : vector<64x64xf32>
    %cst_92 = arith.constant dense<0.000000e+00> : vector<64xf32>
    %203 = vector.multi_reduction <add>, %202, %cst_92 [1] : vector<64x64xf32> to vector<64xf32>
    %204 = vector.shape_cast %203 : vector<64xf32> to vector<64x1xf32>
    %205 = tpu.reciprocal %204 {approx = true} : vector<64x1xf32> -> vector<64x1xf32>
    %206 = vector.broadcast %205 : vector<64x1xf32> to vector<64x64xf32>
    %207 = arith.mulf %202, %206 : vector<64x64xf32>
    %208 = arith.truncf %207 : vector<64x64xf32> to vector<64x64xbf16>
    %cst_93 = arith.constant dense<0.000000e+00> : vector<64x8xf32>
    %209 = tpu.matmul %208, %193, %cst_93 {dimension_numbers = #tpu.dot_dimension_numbers<[1], [0], [0], [1], [0, 0, 1, 1], [], []>} : vector<64x64xbf16>, vector<64x8xbf16>, vector<64x8xf32> -> vector<64x8xf32>
    %210 = vector.extract_strided_slice %209 {offsets = [0, 0], sizes = [16, 8], strides = [1, 1]} : vector<64x8xf32> to vector<16x8xf32>
    %211 = vector.extract_strided_slice %209 {offsets = [16, 0], sizes = [16, 8], strides = [1, 1]} : vector<64x8xf32> to vector<16x8xf32>
    %212 = vector.extract_strided_slice %209 {offsets = [32, 0], sizes = [16, 8], strides = [1, 1]} : vector<64x8xf32> to vector<16x8xf32>
    %213 = vector.extract_strided_slice %209 {offsets = [48, 0], sizes = [16, 8], strides = [1, 1]} : vector<64x8xf32> to vector<16x8xf32>
    %214 = tpu.concatenate %210, %211, %212, %213 in 1 : vector<16x8xf32>, vector<16x8xf32>, vector<16x8xf32>, vector<16x8xf32> -> vector<16x32xf32>
    %215 = arith.truncf %214 : vector<16x32xf32> to vector<16x32xbf16>
    %c1_94 = arith.constant 1 : index
    %c0_95 = arith.constant 0 : index
    %c0_96 = arith.constant 0 : index
    %216 = vector.load %arg8[%c1_94, %c0_95, %c0_96] : memref<2x32x32xbf16, #tpu.memory_space<vmem>>, vector<1x32x32xbf16>
    %217 = vector.shape_cast %216 : vector<1x32x32xbf16> to vector<32x32xbf16>
    %cst_97 = arith.constant dense<0.000000e+00> : vector<16x32xf32>
    %218 = tpu.matmul %215, %217, %cst_97 {dimension_numbers = #tpu.dot_dimension_numbers<[1], [0], [0], [1], [0, 0, 1, 1], [], []>} : vector<16x32xbf16>, vector<32x32xbf16>, vector<16x32xf32> -> vector<16x32xf32>
    %c1_98 = arith.constant 1 : index
    %c0_99 = arith.constant 0 : index
    %c0_100 = arith.constant 0 : index
    %219 = vector.load %arg9[%c1_98, %c0_99, %c0_100] : memref<2x1x32xf32, #tpu.memory_space<vmem>>, vector<1x1x32xf32>
    %220 = vector.shape_cast %219 : vector<1x1x32xf32> to vector<1x32xf32>
    %221 = vector.broadcast %220 : vector<1x32xf32> to vector<16x32xf32>
    %222 = arith.addf %218, %221 : vector<16x32xf32>
    %c1_101 = arith.constant 1 : index
    %c0_102 = arith.constant 0 : index
    %c0_103 = arith.constant 0 : index
    %223 = vector.load %arg10[%c1_101, %c0_102, %c0_103] : memref<2x1x32xf32, #tpu.memory_space<vmem>>, vector<1x1x32xf32>
    %224 = vector.shape_cast %223 : vector<1x1x32xf32> to vector<1x32xf32>
    %225 = vector.broadcast %224 : vector<1x32xf32> to vector<16x32xf32>
    %226 = arith.mulf %222, %225 : vector<16x32xf32>
    %227 = arith.addf %145, %226 : vector<16x32xf32>
    %c1_104 = arith.constant 1 : index
    %c0_105 = arith.constant 0 : index
    %c0_106 = arith.constant 0 : index
    %228 = vector.load %arg11[%c1_104, %c0_105, %c0_106] : memref<2x1x32xf32, #tpu.memory_space<vmem>>, vector<1x1x32xf32>
    %229 = vector.shape_cast %228 : vector<1x1x32xf32> to vector<1x32xf32>
    %c1_107 = arith.constant 1 : index
    %c0_108 = arith.constant 0 : index
    %c0_109 = arith.constant 0 : index
    %230 = vector.load %arg12[%c1_107, %c0_108, %c0_109] : memref<2x1x32xf32, #tpu.memory_space<vmem>>, vector<1x1x32xf32>
    %231 = vector.shape_cast %230 : vector<1x1x32xf32> to vector<1x32xf32>
    %cst_110 = arith.constant dense<0.000000e+00> : vector<16xf32>
    %232 = vector.multi_reduction <add>, %227, %cst_110 [1] : vector<16x32xf32> to vector<16xf32>
    %233 = vector.shape_cast %232 : vector<16xf32> to vector<16x1xf32>
    %cst_111 = arith.constant 3.200000e+01 : f32
    %234 = vector.broadcast %cst_111 : f32 to vector<16x1xf32>
    %235 = arith.divf %233, %234 : vector<16x1xf32>
    %236 = vector.broadcast %235 : vector<16x1xf32> to vector<16x32xf32>
    %237 = arith.subf %227, %236 : vector<16x32xf32>
    %238 = arith.mulf %237, %237 : vector<16x32xf32>
    %cst_112 = arith.constant dense<0.000000e+00> : vector<16xf32>
    %239 = vector.multi_reduction <add>, %238, %cst_112 [1] : vector<16x32xf32> to vector<16xf32>
    %240 = vector.shape_cast %239 : vector<16xf32> to vector<16x1xf32>
    %cst_113 = arith.constant 3.200000e+01 : f32
    %241 = vector.broadcast %cst_113 : f32 to vector<16x1xf32>
    %242 = arith.divf %240, %241 : vector<16x1xf32>
    %cst_114 = arith.constant 9.99999997E-7 : f32
    %243 = vector.broadcast %cst_114 : f32 to vector<16x1xf32>
    %244 = arith.addf %242, %243 : vector<16x1xf32>
    %245 = math.rsqrt %244 : vector<16x1xf32>
    %246 = vector.broadcast %245 : vector<16x1xf32> to vector<16x32xf32>
    %247 = arith.mulf %237, %246 : vector<16x32xf32>
    %248 = vector.broadcast %229 : vector<1x32xf32> to vector<16x32xf32>
    %249 = arith.mulf %247, %248 : vector<16x32xf32>
    %250 = vector.broadcast %231 : vector<1x32xf32> to vector<16x32xf32>
    %251 = arith.addf %249, %250 : vector<16x32xf32>
    %252 = arith.truncf %251 : vector<16x32xf32> to vector<16x32xbf16>
    %c1_115 = arith.constant 1 : index
    %c0_116 = arith.constant 0 : index
    %c0_117 = arith.constant 0 : index
    %253 = vector.load %arg13[%c1_115, %c0_116, %c0_117] : memref<2x32x128xbf16, #tpu.memory_space<vmem>>, vector<1x32x128xbf16>
    %254 = vector.shape_cast %253 : vector<1x32x128xbf16> to vector<32x128xbf16>
    %cst_118 = arith.constant dense<0.000000e+00> : vector<16x128xf32>
    %255 = tpu.matmul %252, %254, %cst_118 {dimension_numbers = #tpu.dot_dimension_numbers<[1], [0], [0], [1], [0, 0, 1, 1], [], []>} : vector<16x32xbf16>, vector<32x128xbf16>, vector<16x128xf32> -> vector<16x128xf32>
    %c1_119 = arith.constant 1 : index
    %c0_120 = arith.constant 0 : index
    %c0_121 = arith.constant 0 : index
    %256 = vector.load %arg14[%c1_119, %c0_120, %c0_121] : memref<2x1x128xf32, #tpu.memory_space<vmem>>, vector<1x1x128xf32>
    %257 = vector.shape_cast %256 : vector<1x1x128xf32> to vector<1x128xf32>
    %258 = vector.broadcast %257 : vector<1x128xf32> to vector<16x128xf32>
    %259 = arith.addf %255, %258 : vector<16x128xf32>
    %260 = arith.mulf %259, %259 : vector<16x128xf32>
    %261 = arith.mulf %259, %260 : vector<16x128xf32>
    %cst_122 = arith.constant 4.471500e-02 : f32
    %262 = vector.broadcast %cst_122 : f32 to vector<16x128xf32>
    %263 = arith.mulf %262, %261 : vector<16x128xf32>
    %264 = arith.addf %259, %263 : vector<16x128xf32>
    %cst_123 = arith.constant 0.797884583 : f32
    %265 = vector.broadcast %cst_123 : f32 to vector<16x128xf32>
    %266 = arith.mulf %265, %264 : vector<16x128xf32>
    %267 = math.tanh %266 : vector<16x128xf32>
    %cst_124 = arith.constant 1.000000e+00 : f32
    %268 = vector.broadcast %cst_124 : f32 to vector<16x128xf32>
    %269 = arith.addf %268, %267 : vector<16x128xf32>
    %cst_125 = arith.constant 5.000000e-01 : f32
    %270 = vector.broadcast %cst_125 : f32 to vector<16x128xf32>
    %271 = arith.mulf %270, %269 : vector<16x128xf32>
    %272 = arith.mulf %259, %271 : vector<16x128xf32>
    %273 = arith.truncf %272 : vector<16x128xf32> to vector<16x128xbf16>
    %c1_126 = arith.constant 1 : index
    %c0_127 = arith.constant 0 : index
    %c0_128 = arith.constant 0 : index
    %274 = vector.load %arg15[%c1_126, %c0_127, %c0_128] : memref<2x128x32xbf16, #tpu.memory_space<vmem>>, vector<1x128x32xbf16>
    %275 = vector.shape_cast %274 : vector<1x128x32xbf16> to vector<128x32xbf16>
    %cst_129 = arith.constant dense<0.000000e+00> : vector<16x32xf32>
    %276 = tpu.matmul %273, %275, %cst_129 {dimension_numbers = #tpu.dot_dimension_numbers<[1], [0], [0], [1], [0, 0, 1, 1], [], []>} : vector<16x128xbf16>, vector<128x32xbf16>, vector<16x32xf32> -> vector<16x32xf32>
    %c1_130 = arith.constant 1 : index
    %c0_131 = arith.constant 0 : index
    %c0_132 = arith.constant 0 : index
    %277 = vector.load %arg16[%c1_130, %c0_131, %c0_132] : memref<2x1x32xf32, #tpu.memory_space<vmem>>, vector<1x1x32xf32>
    %278 = vector.shape_cast %277 : vector<1x1x32xf32> to vector<1x32xf32>
    %279 = vector.broadcast %278 : vector<1x32xf32> to vector<16x32xf32>
    %280 = arith.addf %276, %279 : vector<16x32xf32>
    %c1_133 = arith.constant 1 : index
    %c0_134 = arith.constant 0 : index
    %c0_135 = arith.constant 0 : index
    %281 = vector.load %arg17[%c1_133, %c0_134, %c0_135] : memref<2x1x32xf32, #tpu.memory_space<vmem>>, vector<1x1x32xf32>
    %282 = vector.shape_cast %281 : vector<1x1x32xf32> to vector<1x32xf32>
    %283 = vector.broadcast %282 : vector<1x32xf32> to vector<16x32xf32>
    %284 = arith.mulf %280, %283 : vector<16x32xf32>
    %285 = arith.addf %227, %284 : vector<16x32xf32>
    %c0_136 = arith.constant 0 : index
    %c0_137 = arith.constant 0 : index
    %286 = vector.load %arg18[%c0_136, %c0_137] : memref<1x32xf32, #tpu.memory_space<vmem>>, vector<1x32xf32>
    %c0_138 = arith.constant 0 : index
    %c0_139 = arith.constant 0 : index
    %287 = vector.load %arg19[%c0_138, %c0_139] : memref<1x32xf32, #tpu.memory_space<vmem>>, vector<1x32xf32>
    %cst_140 = arith.constant dense<0.000000e+00> : vector<16xf32>
    %288 = vector.multi_reduction <add>, %285, %cst_140 [1] : vector<16x32xf32> to vector<16xf32>
    %289 = vector.shape_cast %288 : vector<16xf32> to vector<16x1xf32>
    %cst_141 = arith.constant 3.200000e+01 : f32
    %290 = vector.broadcast %cst_141 : f32 to vector<16x1xf32>
    %291 = arith.divf %289, %290 : vector<16x1xf32>
    %292 = vector.broadcast %291 : vector<16x1xf32> to vector<16x32xf32>
    %293 = arith.subf %285, %292 : vector<16x32xf32>
    %294 = arith.mulf %293, %293 : vector<16x32xf32>
    %cst_142 = arith.constant dense<0.000000e+00> : vector<16xf32>
    %295 = vector.multi_reduction <add>, %294, %cst_142 [1] : vector<16x32xf32> to vector<16xf32>
    %296 = vector.shape_cast %295 : vector<16xf32> to vector<16x1xf32>
    %cst_143 = arith.constant 3.200000e+01 : f32
    %297 = vector.broadcast %cst_143 : f32 to vector<16x1xf32>
    %298 = arith.divf %296, %297 : vector<16x1xf32>
    %cst_144 = arith.constant 9.99999997E-7 : f32
    %299 = vector.broadcast %cst_144 : f32 to vector<16x1xf32>
    %300 = arith.addf %298, %299 : vector<16x1xf32>
    %301 = math.rsqrt %300 : vector<16x1xf32>
    %302 = vector.broadcast %301 : vector<16x1xf32> to vector<16x32xf32>
    %303 = arith.mulf %293, %302 : vector<16x32xf32>
    %304 = vector.broadcast %286 : vector<1x32xf32> to vector<16x32xf32>
    %305 = arith.mulf %303, %304 : vector<16x32xf32>
    %306 = vector.broadcast %287 : vector<1x32xf32> to vector<16x32xf32>
    %307 = arith.addf %305, %306 : vector<16x32xf32>
    %308 = vector.extract_strided_slice %307 {offsets = [0, 0], sizes = [1, 32], strides = [1, 1]} : vector<16x32xf32> to vector<1x32xf32>
    %309 = vector.extract_strided_slice %307 {offsets = [8, 0], sizes = [1, 32], strides = [1, 1]} : vector<16x32xf32> to vector<1x32xf32>
    %310 = tpu.concatenate %308, %309 in 0 : vector<1x32xf32>, vector<1x32xf32> -> vector<2x32xf32>
    %c0_145 = arith.constant 0 : index
    %c0_146 = arith.constant 0 : index
    %311 = vector.load %arg20[%c0_145, %c0_146] : memref<1x32xf32, #tpu.memory_space<vmem>>, vector<1x32xf32>
    %312 = vector.broadcast %311 : vector<1x32xf32> to vector<2x32xf32>
    %313 = arith.mulf %310, %312 : vector<2x32xf32>
    %cst_147 = arith.constant dense<0.000000e+00> : vector<2xf32>
    %314 = vector.multi_reduction <add>, %313, %cst_147 [1] : vector<2x32xf32> to vector<2xf32>
    %315 = vector.shape_cast %314 : vector<2xf32> to vector<2x1xf32>
    %c0_148 = arith.constant 0 : index
    %c0_149 = arith.constant 0 : index
    %316 = vector.load %arg21[%c0_148, %c0_149] : memref<1x384xf32, #tpu.memory_space<vmem>>, vector<1x384xf32>
    %317 = vector.broadcast %315 : vector<2x1xf32> to vector<2x384xf32>
    %318 = vector.broadcast %316 : vector<1x384xf32> to vector<2x384xf32>
    %319 = arith.addf %317, %318 : vector<2x384xf32>
    %c0_150 = arith.constant 0 : index
    %c0_151 = arith.constant 0 : index
    %320 = vector.load %arg23[%c0_150, %c0_151] : memref<2x384xf32, #tpu.memory_space<vmem>>, vector<2x384xf32>
    tpu.vector_store %arg23[%c0_150, %c0_151], %319 {strides = array<i32>} : memref<2x384xf32, #tpu.memory_space<vmem>>, vector<2x384xf32>,
    %c0_152 = arith.constant 0 : index
    %c0_153 = arith.constant 0 : index
    %321 = vector.load %arg22[%c0_152, %c0_153] : memref<2x1xi32, #tpu.memory_space<vmem>>, vector<2x1xi32>
    %322 = tpu.iota {dimensions = array<i32: 1>} : vector<2x384xi32>
    %323 = vector.broadcast %321 : vector<2x1xi32> to vector<2x384xi32>
    %324 = arith.cmpi slt, %322, %323 : vector<2x384xi32>
    %325 = arith.extui %324 : vector<2x384xi1> to vector<2x384xi32>
    %326 = arith.sitofp %325 : vector<2x384xi32> to vector<2x384xf32>
    %c299_i32 = arith.constant 299 : i32
    %327 = vector.broadcast %c299_i32 : i32 to vector<2x384xi32>
    %328 = arith.cmpi slt, %322, %327 : vector<2x384xi32>
    %329 = arith.extui %328 : vector<2x384xi1> to vector<2x384xi32>
    %330 = arith.sitofp %329 : vector<2x384xi32> to vector<2x384xf32>
    %cst_154 = arith.constant 0.000000e+00 : f32
    %331 = vector.broadcast %cst_154 : f32 to vector<2x384xf32>
    %332 = arith.minimumf %319, %331 : vector<2x384xf32>
    %333 = math.absf %319 : vector<2x384xf32>
    %cst_155 = arith.constant 0.000000e+00 : f32
    %334 = vector.broadcast %cst_155 : f32 to vector<2x384xf32>
    %335 = arith.subf %334, %333 : vector<2x384xf32>
    %336 = math.exp %335 : vector<2x384xf32>
    %cst_156 = arith.constant 1.000000e+00 : f32
    %337 = vector.broadcast %cst_156 : f32 to vector<2x384xf32>
    %338 = arith.addf %337, %336 : vector<2x384xf32>
    %339 = math.log %338 : vector<2x384xf32>
    %340 = arith.subf %332, %339 : vector<2x384xf32>
    %341 = arith.mulf %340, %326 : vector<2x384xf32>
    %342 = arith.subf %340, %319 : vector<2x384xf32>
    %cst_157 = arith.constant 1.000000e+00 : f32
    %343 = vector.broadcast %cst_157 : f32 to vector<2x384xf32>
    %344 = arith.subf %343, %326 : vector<2x384xf32>
    %345 = arith.mulf %342, %344 : vector<2x384xf32>
    %346 = arith.addf %341, %345 : vector<2x384xf32>
    %347 = arith.mulf %346, %330 : vector<2x384xf32>
    %cst_158 = arith.constant dense<0.000000e+00> : vector<2xf32>
    %348 = vector.multi_reduction <add>, %347, %cst_158 [1] : vector<2x384xf32> to vector<2xf32>
    %349 = vector.shape_cast %348 : vector<2xf32> to vector<2x1xf32>
    %cst_159 = arith.constant dense<0.000000e+00> : vector<1xf32>
    %350 = vector.multi_reduction <add>, %349, %cst_159 [0] : vector<2x1xf32> to vector<1xf32>
    %351 = vector.shape_cast %350 : vector<1xf32> to vector<1x1xf32>
    %cst_160 = arith.constant 0.000000e+00 : f32
    %352 = vector.broadcast %cst_160 : f32 to vector<1x1xf32>
    %353 = arith.subf %352, %351 : vector<1x1xf32>
    %cst_161 = arith.constant 5.000000e-01 : f32
    %354 = vector.broadcast %cst_161 : f32 to vector<1x1xf32>
    %355 = arith.mulf %353, %354 : vector<1x1xf32>
    %c0_162 = arith.constant 0 : index
    %c0_163 = arith.constant 0 : index
    %356 = vector.load %arg24[%c0_162, %c0_163] : memref<1x1xf32, #tpu.memory_space<vmem>>, vector<1x1xf32>
    tpu.vector_store %arg24[%c0_162, %c0_163], %355 {strides = array<i32>} : memref<1x1xf32, #tpu.memory_space<vmem>>, vector<1x1xf32>,
    return
  }
}

</mosaic_0001>

<llo_original>
// kernel: dinov2_coral_forward.1
$region0: #{dinov2_coral_forward.1}
  #allocation0 [shape = 'u32[]', space=smem, size = 0x4, offset = 0x4, fixed_abs, tag = 'smem constant byte address 0x4 - core index']
  #allocation1 [shape = 'u32[144,128]{1,0:T(1,128)}', space=vmem, size = 0x12000, scoped, tag = 'internal scratch']
  %s0 = inlined_call_operand.vmem [shape: bf16[16,192], index: 0, kind: input, shape index: {}]
  %s1 = inlined_call_operand.vmem [shape: bf16[192,32], index: 1, kind: input, shape index: {}]
  %s2 = inlined_call_operand.vmem [shape: f32[16,32], index: 2, kind: input, shape index: {}]
  %s3 = inlined_call_operand.vmem [shape: f32[64,64], index: 3, kind: input, shape index: {}]
  %s4 = inlined_call_operand.vmem [shape: f32[2,1,32], index: 4, kind: input, shape index: {}]
  %s5 = inlined_call_operand.vmem [shape: f32[2,1,32], index: 5, kind: input, shape index: {}]
  %s6 = inlined_call_operand.vmem [shape: bf16[2,32,96], index: 6, kind: input, shape index: {}]
  %s7 = inlined_call_operand.vmem [shape: f32[2,1,96], index: 7, kind: input, shape index: {}]
  %s8 = inlined_call_operand.vmem [shape: bf16[2,32,32], index: 8, kind: input, shape index: {}]
  %s9 = inlined_call_operand.vmem [shape: f32[2,1,32], index: 9, kind: input, shape index: {}]
  %s10 = inlined_call_operand.vmem [shape: f32[2,1,32], index: 10, kind: input, shape index: {}]
  %s11 = inlined_call_operand.vmem [shape: f32[2,1,32], index: 11, kind: input, shape index: {}]
  %s12 = inlined_call_operand.vmem [shape: f32[2,1,32], index: 12, kind: input, shape index: {}]
  %s13 = inlined_call_operand.vmem [shape: bf16[2,32,128], index: 13, kind: input, shape index: {}]
  %s14 = inlined_call_operand.vmem [shape: f32[2,1,128], index: 14, kind: input, shape index: {}]
  %s15 = inlined_call_operand.vmem [shape: bf16[2,128,32], index: 15, kind: input, shape index: {}]
  %s16 = inlined_call_operand.vmem [shape: f32[2,1,32], index: 16, kind: input, shape index: {}]
  %s17 = inlined_call_operand.vmem [shape: f32[2,1,32], index: 17, kind: input, shape index: {}]
  %s18 = inlined_call_operand.vmem [shape: f32[1,32], index: 18, kind: input, shape index: {}]
  %s19 = inlined_call_operand.vmem [shape: f32[1,32], index: 19, kind: input, shape index: {}]
  %s20 = inlined_call_operand.vmem [shape: f32[1,32], index: 20, kind: input, shape index: {}]
  %s21 = inlined_call_operand.vmem [shape: f32[1,384], index: 21, kind: input, shape index: {}]
  %s22 = inlined_call_operand.vmem [shape: s32[2,1], index: 22, kind: input, shape index: {}]
  %s23 = inlined_call_operand.hbm [shape: f32[2,384], index: 23, kind: output, shape index: {0}]
  %s24 = inlined_call_operand.hbm [shape: f32[1,1], index: 24, kind: output, shape index: {1}]
  %25 = xla_tuple %s23, %s24
  %s26 = sld [smem:[#allocation0]]
  $region110: #{dinov2_coral_forward.1} parent=0
    _
  %s28 = ssub.s32 1, %s26
  %s29 = scalar_select 0, %s28, %s26
  $region1: #{dinov2_coral_forward.1} parent=0
    #allocation2 [shape = 'u8[3072]{0}', space=vmem, size = 0xc00, scoped, tag = 'output window, operand 0, single buffered']
    #allocation3 [shape = 's32[1]{0}', space=sflag, size = 0x4, scoped, tag = 'scoped memory for dinov2_coral_forward.1']
    #allocation4 [shape = 'u8[512]{0}', space=vmem, size = 0x400, scoped, tag = 'output window, operand 1, single buffered']
    #allocation5 [shape = 's32[1]{0}', space=sflag, size = 0x4, scoped, tag = 'scoped memory for dinov2_coral_forward.1']
    %30 = vsyncpa [#allocation3], 0
    %31 = vsyncpa [#allocation5], 0
    // Predicated region
    $region2: #{dinov2_coral_forward.1} parent=1 // pred_check
      _
    $region3: #{dinov2_coral_forward.1} parent=1 // pred_check_branch
      %33 = sbr.rel (0) target = $region5
    $region4: #{dinov2_coral_forward.1} parent=1 // pred_region
      _
    $region5: #{dinov2_coral_forward.1} parent=1 // pred_fallthru
      _
    // Predicated region
    $region6: #{dinov2_coral_forward.1} parent=1 // pred_check
      _
    $region7: #{dinov2_coral_forward.1} parent=1 // pred_check_branch
      %35 = sbr.rel (0) target = $region9
    $region8: #{dinov2_coral_forward.1} parent=1 // pred_region
      _
    $region9: #{dinov2_coral_forward.1} parent=1 // pred_fallthru
      _
    // Predicated region
    $region10: #{dinov2_coral_forward.1} parent=1 // pred_check
      _
    $region11: #{dinov2_coral_forward.1} parent=1 // pred_check_branch
      %37 = sbr.rel (0) target = $region13
    $region12: #{dinov2_coral_forward.1} parent=1 // pred_region
      _
    $region13: #{dinov2_coral_forward.1} parent=1 // pred_fallthru
      _
    // Predicated region
    $region14: #{dinov2_coral_forward.1} parent=1 // pred_check
      _
    $region15: #{dinov2_coral_forward.1} parent=1 // pred_check_branch
      %39 = sbr.rel (0) target = $region17
    $region16: #{dinov2_coral_forward.1} parent=1 // pred_region
      _
    $region17: #{dinov2_coral_forward.1} parent=1 // pred_fallthru
      _
    // Predicated region
    $region18: #{dinov2_coral_forward.1} parent=1 // pred_check
      _
    $region19: #{dinov2_coral_forward.1} parent=1 // pred_check_branch
      %41 = sbr.rel (0) target = $region21
    $region20: #{dinov2_coral_forward.1} parent=1 // pred_region
      _
    $region21: #{dinov2_coral_forward.1} parent=1 // pred_fallthru
      _
    // Predicated region
    $region22: #{dinov2_coral_forward.1} parent=1 // pred_check
      _
    $region23: #{dinov2_coral_forward.1} parent=1 // pred_check_branch
      %43 = sbr.rel (0) target = $region25
    $region24: #{dinov2_coral_forward.1} parent=1 // pred_region
      _
    $region25: #{dinov2_coral_forward.1} parent=1 // pred_fallthru
      _
    // Predicated region
    $region26: #{dinov2_coral_forward.1} parent=1 // pred_check
      _
    $region27: #{dinov2_coral_forward.1} parent=1 // pred_check_branch
      %45 = sbr.rel (0) target = $region29
    $region28: #{dinov2_coral_forward.1} parent=1 // pred_region
      _
    $region29: #{dinov2_coral_forward.1} parent=1 // pred_fallthru
      _
    // Predicated region
    $region30: #{dinov2_coral_forward.1} parent=1 // pred_check
      _
    $region31: #{dinov2_coral_forward.1} parent=1 // pred_check_branch
      %47 = sbr.rel (0) target = $region33
    $region32: #{dinov2_coral_forward.1} parent=1 // pred_region
      _
    $region33: #{dinov2_coral_forward.1} parent=1 // pred_fallthru
      _
    // Predicated region
    $region34: #{dinov2_coral_forward.1} parent=1 // pred_check
      _
    $region35: #{dinov2_coral_forward.1} parent=1 // pred_check_branch
      %49 = sbr.rel (0) target = $region37
    $region36: #{dinov2_coral_forward.1} parent=1 // pred_region
      _
    $region37: #{dinov2_coral_forward.1} parent=1 // pred_fallthru
      _
    // Predicated region
    $region38: #{dinov2_coral_forward.1} parent=1 // pred_check
      _
    $region39: #{dinov2_coral_forward.1} parent=1 // pred_check_branch
      %51 = sbr.rel (0) target = $region41
    $region40: #{dinov2_coral_forward.1} parent=1 // pred_region
      _
    $region41: #{dinov2_coral_forward.1} parent=1 // pred_fallthru
      _
    // Predicated region
    $region42: #{dinov2_coral_forward.1} parent=1 // pred_check
      _
    $region43: #{dinov2_coral_forward.1} parent=1 // pred_check_branch
      %53 = sbr.rel (0) target = $region45
    $region44: #{dinov2_coral_forward.1} parent=1 // pred_region
      _
    $region45: #{dinov2_coral_forward.1} parent=1 // pred_fallthru
      _
    // Predicated region
    $region46: #{dinov2_coral_forward.1} parent=1 // pred_check
      _
    $region47: #{dinov2_coral_forward.1} parent=1 // pred_check_branch
      %55 = sbr.rel (0) target = $region49
    $region48: #{dinov2_coral_forward.1} parent=1 // pred_region
      _
    $region49: #{dinov2_coral_forward.1} parent=1 // pred_fallthru
      _
    // Predicated region
    $region50: #{dinov2_coral_forward.1} parent=1 // pred_check
      _
    $region51: #{dinov2_coral_forward.1} parent=1 // pred_check_branch
      %57 = sbr.rel (0) target = $region53
    $region52: #{dinov2_coral_forward.1} parent=1 // pred_region
      _
    $region53: #{dinov2_coral_forward.1} parent=1 // pred_fallthru
      _
    // Predicated region
    $region54: #{dinov2_coral_forward.1} parent=1 // pred_check
      _
    $region55: #{dinov2_coral_forward.1} parent=1 // pred_check_branch
      %59 = sbr.rel (0) target = $region57
    $region56: #{dinov2_coral_forward.1} parent=1 // pred_region
      _
    $region57: #{dinov2_coral_forward.1} parent=1 // pred_fallthru
      _
    // Predicated region
    $region58: #{dinov2_coral_forward.1} parent=1 // pred_check
      _
    $region59: #{dinov2_coral_forward.1} parent=1 // pred_check_branch
      %61 = sbr.rel (0) target = $region61
    $region60: #{dinov2_coral_forward.1} parent=1 // pred_region
      _
    $region61: #{dinov2_coral_forward.1} parent=1 // pred_fallthru
      _
    // Predicated region
    $region62: #{dinov2_coral_forward.1} parent=1 // pred_check
      _
    $region63: #{dinov2_coral_forward.1} parent=1 // pred_check_branch
      %63 = sbr.rel (0) target = $region65
    $region64: #{dinov2_coral_forward.1} parent=1 // pred_region
      _
    $region65: #{dinov2_coral_forward.1} parent=1 // pred_fallthru
      _
    // Predicated region
    $region66: #{dinov2_coral_forward.1} parent=1 // pred_check
      _
    $region67: #{dinov2_coral_forward.1} parent=1 // pred_check_branch
      %65 = sbr.rel (0) target = $region69
    $region68: #{dinov2_coral_forward.1} parent=1 // pred_region
      _
    $region69: #{dinov2_coral_forward.1} parent=1 // pred_fallthru
      _
    // Predicated region
    $region70: #{dinov2_coral_forward.1} parent=1 // pred_check
      _
    $region71: #{dinov2_coral_forward.1} parent=1 // pred_check_branch
      %67 = sbr.rel (0) target = $region73
    $region72: #{dinov2_coral_forward.1} parent=1 // pred_region
      _
    $region73: #{dinov2_coral_forward.1} parent=1 // pred_fallthru
      _
    // Predicated region
    $region74: #{dinov2_coral_forward.1} parent=1 // pred_check
      _
    $region75: #{dinov2_coral_forward.1} parent=1 // pred_check_branch
      %69 = sbr.rel (0) target = $region77
    $region76: #{dinov2_coral_forward.1} parent=1 // pred_region
      _
    $region77: #{dinov2_coral_forward.1} parent=1 // pred_fallthru
      _
    // Predicated region
    $region78: #{dinov2_coral_forward.1} parent=1 // pred_check
      _
    $region79: #{dinov2_coral_forward.1} parent=1 // pred_check_branch
      %71 = sbr.rel (0) target = $region81
    $region80: #{dinov2_coral_forward.1} parent=1 // pred_region
      _
    $region81: #{dinov2_coral_forward.1} parent=1 // pred_fallthru
      _
    // Predicated region
    $region82: #{dinov2_coral_forward.1} parent=1 // pred_check
      _
    $region83: #{dinov2_coral_forward.1} parent=1 // pred_check_branch
      %73 = sbr.rel (0) target = $region85
    $region84: #{dinov2_coral_forward.1} parent=1 // pred_region
      _
    $region85: #{dinov2_coral_forward.1} parent=1 // pred_fallthru
      _
    // Predicated region
    $region86: #{dinov2_coral_forward.1} parent=1 // pred_check
      _
    $region87: #{dinov2_coral_forward.1} parent=1 // pred_check_branch
      %75 = sbr.rel (0) target = $region89
    $region88: #{dinov2_coral_forward.1} parent=1 // pred_region
      _
    $region89: #{dinov2_coral_forward.1} parent=1 // pred_fallthru
      _
    // Predicated region
    $region90: #{dinov2_coral_forward.1} parent=1 // pred_check
      _
    $region91: #{dinov2_coral_forward.1} parent=1 // pred_check_branch
      %77 = sbr.rel (0) target = $region93
    $region92: #{dinov2_coral_forward.1} parent=1 // pred_region
      _
    $region93: #{dinov2_coral_forward.1} parent=1 // pred_fallthru
      _
    %v79 = vld [vmem:[%s0] sm:$0xff]
    %v80 = vld [vmem:[%s0 + $0x8] sm:$0xff]
    %v81 = vld [vmem:[%s1] sm:$0xf]
    %v82 = vld [vmem:[%s1 + $0x4] sm:$0xf]
    %v83 = vld [vmem:[%s1 + $0x8] sm:$0xf]
    %v84 = vld [vmem:[%s1 + $0xc] sm:$0xf]
    %v85 = vld [vmem:[%s1 + $0x10] sm:$0xf]
    %v86 = vld [vmem:[%s1 + $0x14] sm:$0xf]
    %v87 = vld [vmem:[%s1 + $0x18] sm:$0xf]
    %v88 = vld [vmem:[%s1 + $0x1c] sm:$0xf]
    %v89 = vld [vmem:[%s1 + $0x20] sm:$0xf]
    %v90 = vld [vmem:[%s1 + $0x24] sm:$0xf]
    %v91 = vld [vmem:[%s1 + $0x28] sm:$0xf]
    %v92 = vld [vmem:[%s1 + $0x2c] sm:$0xf]
    %v93 = vld [vmem:[%s1 + $0x30] sm:$0xf]
    %v94 = vld [vmem:[%s1 + $0x34] sm:$0xf]
    %v95 = vld [vmem:[%s1 + $0x38] sm:$0xf]
    %v96 = vld [vmem:[%s1 + $0x3c] sm:$0xf]
    %v97 = vld [vmem:[%s1 + $0x40] sm:$0xf]
    %v98 = vld [vmem:[%s1 + $0x44] sm:$0xf]
    %v99 = vld [vmem:[%s1 + $0x48] sm:$0xf]
    %v100 = vld [vmem:[%s1 + $0x4c] sm:$0xf]
    %v101 = vld [vmem:[%s1 + $0x50] sm:$0xf]
    %v102 = vld [vmem:[%s1 + $0x54] sm:$0xf]
    %v103 = vld [vmem:[%s1 + $0x58] sm:$0xf]
    %v104 = vld [vmem:[%s1 + $0x5c] sm:$0xf]
    %v105 = vld [vmem:[%s2] sm:$0xff]
    %v106 = vld [vmem:[%s2 + $0x8] sm:$0xff]
    %v109 = vunpack.c.l.b16 %v79
    %v110 = vunpack.c.h.b16 %v79
    %v111 = vunpack.c.l.b16 %v80
    %v112 = vunpack.c.h.b16 %v80
    %v113 = vpack.c.b16 %v111, %v109
    %v114 = vpack.c.b16 %v112, %v110
    %v140 = vunpack.c.l.b16 %v81
    %v141 = vunpack.c.l.b16 %v82
    %v142 = vunpack.c.l.b16 %v83
    %v143 = vunpack.c.l.b16 %v84
    %v144 = vunpack.c.l.b16 %v85
    %v145 = vunpack.c.l.b16 %v86
    %v146 = vunpack.c.l.b16 %v87
    %v147 = vunpack.c.l.b16 %v88
    %v148 = vunpack.c.l.b16 %v89
    %v149 = vunpack.c.l.b16 %v90
    %v150 = vunpack.c.l.b16 %v91
    %v151 = vunpack.c.l.b16 %v92
    %v152 = vunpack.c.l.b16 %v93
    %v153 = vunpack.c.l.b16 %v94
    %v154 = vunpack.c.l.b16 %v95
    %v155 = vunpack.c.l.b16 %v96
    %v156 = vunpack.c.l.b16 %v97
    %v157 = vunpack.c.l.b16 %v98
    %v158 = vunpack.c.l.b16 %v99
    %v159 = vunpack.c.l.b16 %v100
    %v160 = vunpack.c.l.b16 %v101
    %v161 = vunpack.c.l.b16 %v102
    %v162 = vunpack.c.l.b16 %v103
    %v163 = vunpack.c.l.b16 %v104
    %v164 = vpack.c.b16 %v141, %v140
    %v165 = vpack.c.b16 %v143, %v142
    %v166 = vpack.c.b16 %v145, %v144
    %v167 = vpack.c.b16 %v147, %v146
    %v168 = vpack.c.b16 %v149, %v148
    %v169 = vpack.c.b16 %v151, %v150
    %v170 = vpack.c.b16 %v153, %v152
    %v171 = vpack.c.b16 %v155, %v154
    %v172 = vpack.c.b16 %v157, %v156
    %v173 = vpack.c.b16 %v159, %v158
    %v174 = vpack.c.b16 %v161, %v160
    %v175 = vpack.c.b16 %v163, %v162
    %vm188 = vcmask 523264
    %v190 = vsel %vm188, %v114, 0
    %192 = vmatprep.subr.bf16.mxu0 0
    %193 = vmatpush1.bf16.msra.mxu0 %v164
    %194 = vmatprep.subr.bf16.mxu0 0
    %195 = vmatpush1.bf16.msra.mxu0 %v165
    %196 = vmatprep.subr.bf16.mxu0 0
    %197 = vmatpush1.bf16.msra.mxu0 %v166
    %198 = vmatprep.subr.bf16.mxu0 0
    %199 = vmatpush1.bf16.msra.mxu0 %v167
    %200 = vmatprep.subr.bf16.mxu0 0
    %201 = vmatpush1.bf16.msra.mxu0 %v168
    %202 = vmatprep.subr.bf16.mxu0 0
    %203 = vmatpush1.bf16.msra.mxu0 %v169
    %204 = vmatprep.subr.bf16.mxu0 0
    %205 = vmatpush1.bf16.msra.mxu0 %v170
    %206 = vmatprep.subr.bf16.mxu0 0
    %207 = vmatpush1.bf16.msra.mxu0 %v171
    %208 = vmatprep.subr.bf16.mxu0 0
    %209 = vmatpush1.bf16.msra.mxu0 %v172
    %210 = vmatprep.subr.bf16.mxu0 0
    %211 = vmatpush1.bf16.msra.mxu0 %v173
    %212 = vmatprep.subr.bf16.mxu0 0
    %213 = vmatpush1.bf16.msra.mxu0 %v174
    %214 = vmatprep.subr.bf16.mxu0 0
    %215 = vmatpush1.bf16.msra.mxu0 %v175
    %216 = vmatprep.subr.bf16.mxu0 0
    %217 = vmatpush1.bf16.msra.mxu0 0
    %218 = vmatprep.subr.bf16.mxu0 0
    %219 = vmatpush1.bf16.msra.mxu0 0
    %220 = vmatprep.subr.bf16.mxu0 0
    %221 = vmatpush1.bf16.msra.mxu0 0
    %222 = vmatprep.subr.bf16.mxu0 0
    %223 = vmatpush1.bf16.msra.mxu0 0
    %224 = vmatprep.mubr.bf16.mxu0 %v190
    %225 = vmatmul.mubr.bf16.gmra.mrb[0].mxu0 %v113
    %v226 = vpop.f32.mrb[0].mxu0
    %v227 = vadd.f32 %v105, %v226
    %v228 = vpop.f32.mrb[0].mxu0
    %v229 = vpop.f32.mrb[0].mxu0
    %v230 = vadd.f32 %v106, %v229
    %v231 = vpop.f32.mrb[0].mxu0
    %232 = vdwg.mxu0
    %v233 = vld [vmem:[%s3] sm:$0xff]
    %v234 = vld [vmem:[%s3 + $0x8] sm:$0xff]
    %v235 = vld [vmem:[%s3 + $0x10] sm:$0xff]
    %v236 = vld [vmem:[%s3 + $0x18] sm:$0xff]
    %v237 = vld [vmem:[%s3 + $0x20] sm:$0xff]
    %v238 = vld [vmem:[%s3 + $0x28] sm:$0xff]
    %v239 = vld [vmem:[%s3 + $0x30] sm:$0xff]
    %v240 = vld [vmem:[%s3 + $0x38] sm:$0xff]
    %v241 = vld [vmem:[%s4] sm:$0x1]
    %v242 = vld [vmem:[%s5] sm:$0x1]
    %vm243 = vcmask 261120
    %v244 = vsel %vm243, %v227, 0.0
    %245 = vadd.xlane.f32.xlu0 %v244
    %v246 = vpop.xlane.xlu0 %245
    %v247 = vsel %vm243, %v230, 0.0
    %248 = vadd.xlane.f32.xlu0 %v247
    %v249 = vpop.xlane.xlu0 %248
    %v250 = vrcp.pop 32.0
    %v251 = vmul.f32 %v246, %v250
    %v252 = vmul.f32 %v249, %v250
    %v253 = vsub.f32 %v227, %v251
    %v254 = vsub.f32 %v230, %v252
    %v255 = vmul.f32 %v253, %v253
    %v256 = vmul.f32 %v254, %v254
    %v257 = vsel %vm243, %v255, 0.0
    %258 = vadd.xlane.f32.xlu0 %v257
    %v259 = vpop.xlane.xlu0 %258
    %v260 = vsel %vm243, %v256, 0.0
    %261 = vadd.xlane.f32.xlu0 %v260
    %v262 = vpop.xlane.xlu0 %261
    %v263 = vmul.f32 %v259, %v250
    %v264 = vmul.f32 %v262, %v250
    %v265 = vadd.f32 %v263, 1e-06
    %v266 = vadd.f32 %v264, 1e-06
    %v267 = vrsqrt.pop %v265
    %v268 = vrsqrt.pop %v266
    %v269 = vmul.f32 %v253, %v267
    %v270 = vmul.f32 %v254, %v268
    %v272 = vlaneseq
    %v273 = vshrl.u32 %v272, 7
    %v274 = vsub.s32 0, %v273
    %v275 = vrot.slane %v241, %v274
    %v277 = vmul.f32 %v269, %v275
    %v278 = vmul.f32 %v270, %v275
    %v280 = vlaneseq
    %v281 = vshrl.u32 %v280, 7
    %v282 = vsub.s32 0, %v281
    %v283 = vrot.slane %v242, %v282
    %v285 = vadd.f32 %v277, %v283
    %v286 = vadd.f32 %v278, %v283
    %v287 = vpack.c.bf16 %v286, %v285
    %v288 = vld [vmem:[%s6] sm:$0xf]
    %v289 = vld [vmem:[%s6 + $0x4] sm:$0xf]
    %v290 = vld [vmem:[%s6 + $0x8] sm:$0xf]
    %v291 = vld [vmem:[%s6 + $0xc] sm:$0xf]
    %v292 = vld [vmem:[%s7] sm:$0x1]
    %v294 = vlaneseq
    %v295 = vshrl.u32 %v294, 7
    %v296 = vsub.s32 0, %v295
    %v297 = vrot.slane %v292, %v296
    %v303 = vunpack.c.l.b16 %v288
    %v304 = vunpack.c.l.b16 %v289
    %v305 = vunpack.c.l.b16 %v290
    %v306 = vunpack.c.l.b16 %v291
    %v307 = vpack.c.b16 %v304, %v303
    %v308 = vpack.c.b16 %v306, %v305
    %v312 = vsel %vm243, %v287, 0
    %314 = vmatprep.subr.bf16.mxu0 0
    %315 = vmatpush1.bf16.msra.mxu0 %v307
    %316 = vmatprep.subr.bf16.mxu0 0
    %317 = vmatpush1.bf16.msra.mxu0 %v308
    %318 = vmatprep.subr.bf16.mxu0 0
    %319 = vmatpush1.bf16.msra.mxu0 0
    %320 = vmatprep.subr.bf16.mxu0 0
    %321 = vmatpush1.bf16.msra.mxu0 0
    %322 = vmatprep.subr.bf16.mxu0 0
    %323 = vmatpush1.bf16.msra.mxu0 0
    %324 = vmatprep.subr.bf16.mxu0 0
    %325 = vmatpush1.bf16.msra.mxu0 0
    %326 = vmatprep.subr.bf16.mxu0 0
    %327 = vmatpush1.bf16.msra.mxu0 0
    %328 = vmatprep.subr.bf16.mxu0 0
    %329 = vmatpush1.bf16.msra.mxu0 0
    %330 = vmatprep.subr.bf16.mxu0 0
    %331 = vmatpush1.bf16.msra.mxu0 0
    %332 = vmatprep.subr.bf16.mxu0 0
    %333 = vmatpush1.bf16.msra.mxu0 0
    %334 = vmatprep.subr.bf16.mxu0 0
    %335 = vmatpush1.bf16.msra.mxu0 0
    %336 = vmatprep.subr.bf16.mxu0 0
    %337 = vmatpush1.bf16.msra.mxu0 0
    %338 = vmatprep.subr.bf16.mxu0 0
    %339 = vmatpush1.bf16.msra.mxu0 0
    %340 = vmatprep.subr.bf16.mxu0 0
    %341 = vmatpush1.bf16.msra.mxu0 0
    %342 = vmatprep.subr.bf16.mxu0 0
    %343 = vmatpush1.bf16.msra.mxu0 0
    %344 = vmatprep.subr.bf16.mxu0 0
    %345 = vmatpush1.bf16.msra.mxu0 0
    %346 = vmatprep.mubr.bf16.mxu0 0
    %347 = vmatmul.mubr.bf16.gmra.mrb[0].mxu0 %v312
    %v348 = vpop.f32.mrb[0].mxu0
    %v349 = vadd.f32 %v297, %v348
    %v350 = vpop.f32.mrb[0].mxu0
    %v351 = vpop.f32.mrb[0].mxu0
    %v352 = vadd.f32 %v297, %v351
    %v353 = vpop.f32.mrb[0].mxu0
    %354 = vdwg.mxu0
    %v355 = vpack.c.bf16 %v352, %v349
    %357 = vrot.lane.b32.xlu0 %v355, 120
    %v358 = vpop.permute.xlu0 %357
    %359 = vrot.lane.b32.xlu0 %v355, 112
    %v360 = vpop.permute.xlu0 %359
    %361 = vrot.lane.b32.xlu0 %v355, 104
    %v362 = vpop.permute.xlu0 %361
    %363 = vrot.lane.b32.xlu0 %v355, 96
    %v364 = vpop.permute.xlu0 %363
    %365 = vrot.lane.b32.xlu0 %v358, 96
    %v366 = vpop.permute.xlu0 %365
    %367 = vrot.lane.b32.xlu0 %v360, 96
    %v368 = vpop.permute.xlu0 %367
    %369 = vrot.lane.b32.xlu0 %v362, 96
    %v370 = vpop.permute.xlu0 %369
    %vm371 = vcmask 64512
    %v373 = vsel %vm371, %v355, 0
    %v376 = vsel %vm371, %v358, 0
    %v379 = vsel %vm371, %v360, 0
    %v382 = vsel %vm371, %v362, 0
    %v385 = vsel %vm371, %v364, 0
    %v388 = vsel %vm371, %v366, 0
    %v391 = vsel %vm371, %v368, 0
    %v394 = vsel %vm371, %v370, 0
    %396 = vmatprep.subr.bf16.mxu0 0
    %397 = vmatpush1.bf16.xpose.msra.mxu0 %v385
    %398 = vmatprep.subr.bf16.mxu0 0
    %399 = vmatpush1.bf16.xpose.msra.mxu0 %v388
    %400 = vmatprep.subr.bf16.mxu0 0
    %401 = vmatpush1.bf16.xpose.msra.mxu0 %v391
    %402 = vmatprep.subr.bf16.mxu0 0
    %403 = vmatpush1.bf16.xpose.msra.mxu0 %v394
    %404 = vmatprep.subr.bf16.mxu0 0
    %405 = vmatpush1.bf16.xpose.msra.mxu0 0
    %406 = vmatprep.subr.bf16.mxu0 0
    %407 = vmatpush1.bf16.xpose.msra.mxu0 0
    %408 = vmatprep.subr.bf16.mxu0 0
    %409 = vmatpush1.bf16.xpose.msra.mxu0 0
    %410 = vmatprep.subr.bf16.mxu0 0
    %411 = vmatpush1.bf16.xpose.msra.mxu0 0
    %412 = vmatprep.subr.bf16.mxu0 0
    %413 = vmatpush1.bf16.xpose.msra.mxu0 0
    %414 = vmatprep.subr.bf16.mxu0 0
    %415 = vmatpush1.bf16.xpose.msra.mxu0 0
    %416 = vmatprep.subr.bf16.mxu0 0
    %417 = vmatpush1.bf16.xpose.msra.mxu0 0
    %418 = vmatprep.subr.bf16.mxu0 0
    %419 = vmatpush1.bf16.xpose.msra.mxu0 0
    %420 = vmatprep.subr.bf16.mxu0 0
    %421 = vmatpush1.bf16.xpose.msra.mxu0 0
    %422 = vmatprep.subr.bf16.mxu0 0
    %423 = vmatpush1.bf16.xpose.msra.mxu0 0
    %424 = vmatprep.subr.bf16.mxu0 0
    %425 = vmatpush1.bf16.xpose.msra.mxu0 0
    %426 = vmatprep.subr.bf16.mxu0 0
    %427 = vmatpush1.bf16.xpose.msra.mxu0 0
    %428 = vmatprep.mubr.bf16.mxu0 0
    %429 = vmatmul.mubr.bf16.gmra.mrb[0].mxu0 %v373
    %v430 = vpop.f32.mrb[0].mxu0
    %v431 = vadd.f32 0.0, %v430
    %v432 = vpop.f32.mrb[0].mxu0
    %v433 = vpop.f32.mrb[0].mxu0
    %v434 = vadd.f32 0.0, %v433
    %v435 = vpop.f32.mrb[0].mxu0
    %436 = vmatprep.mubr.bf16.mxu0 0
    %437 = vmatmul.mubr.bf16.gmra.mrb[0].mxu0 %v376
    %v438 = vpop.f32.mrb[0].mxu0
    %v439 = vadd.f32 0.0, %v438
    %v440 = vpop.f32.mrb[0].mxu0
    %v441 = vpop.f32.mrb[0].mxu0
    %v442 = vadd.f32 0.0, %v441
    %v443 = vpop.f32.mrb[0].mxu0
    %444 = vmatprep.mubr.bf16.mxu0 0
    %445 = vmatmul.mubr.bf16.gmra.mrb[0].mxu0 %v379
    %v446 = vpop.f32.mrb[0].mxu0
    %v447 = vadd.f32 0.0, %v446
    %v448 = vpop.f32.mrb[0].mxu0
    %v449 = vpop.f32.mrb[0].mxu0
    %v450 = vadd.f32 0.0, %v449
    %v451 = vpop.f32.mrb[0].mxu0
    %452 = vmatprep.mubr.bf16.mxu0 0
    %453 = vmatmul.mubr.bf16.gmra.mrb[0].mxu0 %v382
    %v454 = vpop.f32.mrb[0].mxu0
    %v455 = vadd.f32 0.0, %v454
    %v456 = vpop.f32.mrb[0].mxu0
    %v457 = vpop.f32.mrb[0].mxu0
    %v458 = vadd.f32 0.0, %v457
    %v459 = vpop.f32.mrb[0].mxu0
    %460 = vdwg.mxu0
    %v461 = vmul.f32 %v431, 0.35355338
    %v462 = vmul.f32 %v434, 0.35355338
    %v463 = vmul.f32 %v439, 0.35355338
    %v464 = vmul.f32 %v442, 0.35355338
    %v465 = vmul.f32 %v447, 0.35355338
    %v466 = vmul.f32 %v450, 0.35355338
    %v467 = vmul.f32 %v455, 0.35355338
    %v468 = vmul.f32 %v458, 0.35355338
    %v469 = vadd.f32 %v461, %v233
    %v470 = vadd.f32 %v462, %v234
    %v471 = vadd.f32 %v463, %v235
    %v472 = vadd.f32 %v464, %v236
    %v473 = vadd.f32 %v465, %v237
    %v474 = vadd.f32 %v466, %v238
    %v475 = vadd.f32 %v467, %v239
    %v476 = vadd.f32 %v468, %v240
    %v477 = vsel %vm188, %v469, -inf
    %478 = vmax.xlane.f32.xlu0 %v477
    %v479 = vpop.xlane.xlu0 %478
    %v480 = vsel %vm188, %v470, -inf
    %481 = vmax.xlane.f32.xlu0 %v480
    %v482 = vpop.xlane.xlu0 %481
    %v483 = vsel %vm188, %v471, -inf
    %484 = vmax.xlane.f32.xlu0 %v483
    %v485 = vpop.xlane.xlu0 %484
    %v486 = vsel %vm188, %v472, -inf
    %487 = vmax.xlane.f32.xlu0 %v486
    %v488 = vpop.xlane.xlu0 %487
    %v489 = vsel %vm188, %v473, -inf
    %490 = vmax.xlane.f32.xlu0 %v489
    %v491 = vpop.xlane.xlu0 %490
    %v492 = vsel %vm188, %v474, -inf
    %493 = vmax.xlane.f32.xlu0 %v492
    %v494 = vpop.xlane.xlu0 %493
    %v495 = vsel %vm188, %v475, -inf
    %496 = vmax.xlane.f32.xlu0 %v495
    %v497 = vpop.xlane.xlu0 %496
    %v498 = vsel %vm188, %v476, -inf
    %499 = vmax.xlane.f32.xlu0 %v498
    %v500 = vpop.xlane.xlu0 %499
    %v501 = vsub.f32 %v469, %v479
    %v502 = vsub.f32 %v470, %v482
    %v503 = vsub.f32 %v471, %v485
    %v504 = vsub.f32 %v472, %v488
    %v505 = vsub.f32 %v473, %v491
    %v506 = vsub.f32 %v474, %v494
    %v507 = vsub.f32 %v475, %v497
    %v508 = vsub.f32 %v476, %v500
    %v509 = vmul.f32 %v501, 1.442695
    %v510 = vpow.pop %v509
    %v511 = vmul.f32 %v502, 1.442695
    %v512 = vpow.pop %v511
    %v513 = vmul.f32 %v503, 1.442695
    %v514 = vpow.pop %v513
    %v515 = vmul.f32 %v504, 1.442695
    %v516 = vpow.pop %v515
    %v517 = vmul.f32 %v505, 1.442695
    %v518 = vpow.pop %v517
    %v519 = vmul.f32 %v506, 1.442695
    %v520 = vpow.pop %v519
    %v521 = vmul.f32 %v507, 1.442695
    %v522 = vpow.pop %v521
    %v523 = vmul.f32 %v508, 1.442695
    %v524 = vpow.pop %v523
    %v525 = vsel %vm188, %v510, 0.0
    %526 = vadd.xlane.f32.xlu0 %v525
    %v527 = vpop.xlane.xlu0 %526
    %v528 = vsel %vm188, %v512, 0.0
    %529 = vadd.xlane.f32.xlu0 %v528
    %v530 = vpop.xlane.xlu0 %529
    %v531 = vsel %vm188, %v514, 0.0
    %532 = vadd.xlane.f32.xlu0 %v531
    %v533 = vpop.xlane.xlu0 %532
    %v534 = vsel %vm188, %v516, 0.0
    %535 = vadd.xlane.f32.xlu0 %v534
    %v536 = vpop.xlane.xlu0 %535
    %v537 = vsel %vm188, %v518, 0.0
    %538 = vadd.xlane.f32.xlu0 %v537
    %v539 = vpop.xlane.xlu0 %538
    %v540 = vsel %vm188, %v520, 0.0
    %541 = vadd.xlane.f32.xlu0 %v540
    %v542 = vpop.xlane.xlu0 %541
    %v543 = vsel %vm188, %v522, 0.0
    %544 = vadd.xlane.f32.xlu0 %v543
    %v545 = vpop.xlane.xlu0 %544
    %v546 = vsel %vm188, %v524, 0.0
    %547 = vadd.xlane.f32.xlu0 %v546
    %v548 = vpop.xlane.xlu0 %547
    %v549 = vrcp.pop %v527
    %v550 = vrcp.pop %v530
    %v551 = vrcp.pop %v533
    %v552 = vrcp.pop %v536
    %v553 = vrcp.pop %v539
    %v554 = vrcp.pop %v542
    %v555 = vrcp.pop %v545
    %v556 = vrcp.pop %v548
    %v557 = vmul.f32 %v510, %v549
    %v558 = vmul.f32 %v512, %v550
    %v559 = vmul.f32 %v514, %v551
    %v560 = vmul.f32 %v516, %v552
    %v561 = vmul.f32 %v518, %v553
    %v562 = vmul.f32 %v520, %v554
    %v563 = vmul.f32 %v522, %v555
    %v564 = vmul.f32 %v524, %v556
    %v565 = vpack.c.bf16 %v558, %v557
    %v566 = vpack.c.bf16 %v560, %v559
    %v567 = vpack.c.bf16 %v562, %v561
    %v568 = vpack.c.bf16 %v564, %v563
    %569 = vrot.lane.b32.xlu0 %v355, 64
    %v570 = vpop.permute.xlu0 %569
    %571 = vrot.lane.b32.xlu0 %v358, 64
    %v572 = vpop.permute.xlu0 %571
    %573 = vrot.lane.b32.xlu0 %v360, 64
    %v574 = vpop.permute.xlu0 %573
    %575 = vrot.lane.b32.xlu0 %v362, 64
    %v576 = vpop.permute.xlu0 %575
    %v582 = vsel %vm188, %v565, 0
    %v585 = vsel %vm188, %v566, 0
    %v588 = vsel %vm188, %v567, 0
    %v591 = vsel %vm188, %v568, 0
    %593 = vmatprep.subr.bf16.mxu0 0
    %594 = vmatpush1.bf16.msra.mxu0 %v570
    %595 = vmatprep.subr.bf16.mxu0 0
    %596 = vmatpush1.bf16.msra.mxu0 %v572
    %597 = vmatprep.subr.bf16.mxu0 0
    %598 = vmatpush1.bf16.msra.mxu0 %v574
    %599 = vmatprep.subr.bf16.mxu0 0
    %600 = vmatpush1.bf16.msra.mxu0 %v576
    %601 = vmatprep.subr.bf16.mxu0 0
    %602 = vmatpush1.bf16.msra.mxu0 0
    %603 = vmatprep.subr.bf16.mxu0 0
    %604 = vmatpush1.bf16.msra.mxu0 0
    %605 = vmatprep.subr.bf16.mxu0 0
    %606 = vmatpush1.bf16.msra.mxu0 0
    %607 = vmatprep.subr.bf16.mxu0 0
    %608 = vmatpush1.bf16.msra.mxu0 0
    %609 = vmatprep.subr.bf16.mxu0 0
    %610 = vmatpush1.bf16.msra.mxu0 0
    %611 = vmatprep.subr.bf16.mxu0 0
    %612 = vmatpush1.bf16.msra.mxu0 0
    %613 = vmatprep.subr.bf16.mxu0 0
    %614 = vmatpush1.bf16.msra.mxu0 0
    %615 = vmatprep.subr.bf16.mxu0 0
    %616 = vmatpush1.bf16.msra.mxu0 0
    %617 = vmatprep.subr.bf16.mxu0 0
    %618 = vmatpush1.bf16.msra.mxu0 0
    %619 = vmatprep.subr.bf16.mxu0 0
    %620 = vmatpush1.bf16.msra.mxu0 0
    %621 = vmatprep.subr.bf16.mxu0 0
    %622 = vmatpush1.bf16.msra.mxu0 0
    %623 = vmatprep.subr.bf16.mxu0 0
    %624 = vmatpush1.bf16.msra.mxu0 0
    %625 = vmatprep.mubr.bf16.mxu0 0
    %626 = vmatmul.mubr.bf16.gmra.mrb[0].mxu0 %v582
    %v627 = vpop.f32.mrb[0].mxu0
    %v628 = vadd.f32 0.0, %v627
    %v629 = vpop.f32.mrb[0].mxu0
    %v630 = vpop.f32.mrb[0].mxu0
    %v631 = vadd.f32 0.0, %v630
    %v632 = vpop.f32.mrb[0].mxu0
    %633 = vmatprep.mubr.bf16.mxu0 0
    %634 = vmatmul.mubr.bf16.gmra.mrb[0].mxu0 %v585
    %v635 = vpop.f32.mrb[0].mxu0
    %v636 = vadd.f32 0.0, %v635
    %v637 = vpop.f32.mrb[0].mxu0
    %v638 = vpop.f32.mrb[0].mxu0
    %v639 = vadd.f32 0.0, %v638
    %v640 = vpop.f32.mrb[0].mxu0
    %641 = vmatprep.mubr.bf16.mxu0 0
    %642 = vmatmul.mubr.bf16.gmra.mrb[0].mxu0 %v588
    %v643 = vpop.f32.mrb[0].mxu0
    %v644 = vadd.f32 0.0, %v643
    %v645 = vpop.f32.mrb[0].mxu0
    %v646 = vpop.f32.mrb[0].mxu0
    %v647 = vadd.f32 0.0, %v646
    %v648 = vpop.f32.mrb[0].mxu0
    %649 = vmatprep.mubr.bf16.mxu0 0
    %650 = vmatmul.mubr.bf16.gmra.mrb[0].mxu0 %v591
    %v651 = vpop.f32.mrb[0].mxu0
    %v652 = vadd.f32 0.0, %v651
    %v653 = vpop.f32.mrb[0].mxu0
    %v654 = vpop.f32.mrb[0].mxu0
    %v655 = vadd.f32 0.0, %v654
    %v656 = vpop.f32.mrb[0].mxu0
    %657 = vdwg.mxu0
    %660 = vrot.lane.b32.xlu0 %v636, 8
    %v661 = vpop.permute.xlu0 %660
    %662 = vrot.lane.b32.xlu0 %v639, 8
    %v663 = vpop.permute.xlu0 %662
    %668 = vrot.lane.b32.xlu0 %v644, 16
    %v669 = vpop.permute.xlu0 %668
    %670 = vrot.lane.b32.xlu0 %v647, 16
    %v671 = vpop.permute.xlu0 %670
    %676 = vrot.lane.b32.xlu0 %v652, 24
    %v677 = vpop.permute.xlu0 %676
    %678 = vrot.lane.b32.xlu0 %v655, 24
    %v679 = vpop.permute.xlu0 %678
    %v682 = vsel %vm371, %v628, %v661
    %v683 = vsel %vm371, %v631, %v663
    %vm684 = vcmask 130048
    %v685 = vsel %vm684, %v682, %v669
    %v686 = vsel %vm684, %v683, %v671
    %vm687 = vcmask 195584
    %v688 = vsel %vm687, %v685, %v677
    %v689 = vsel %vm687, %v686, %v679
    %v690 = vpack.c.bf16 %v689, %v688
    %v691 = vld [vmem:[%s8] sm:$0xf]
    %v692 = vld [vmem:[%s8 + $0x4] sm:$0xf]
    %v693 = vld [vmem:[%s8 + $0x8] sm:$0xf]
    %v694 = vld [vmem:[%s8 + $0xc] sm:$0xf]
    %v695 = vld [vmem:[%s9] sm:$0x1]
    %v697 = vlaneseq
    %v698 = vshrl.u32 %v697, 7
    %v699 = vsub.s32 0, %v698
    %v700 = vrot.slane %v695, %v699
    %v706 = vunpack.c.l.b16 %v691
    %v707 = vunpack.c.l.b16 %v692
    %v708 = vunpack.c.l.b16 %v693
    %v709 = vunpack.c.l.b16 %v694
    %v710 = vpack.c.b16 %v707, %v706
    %v711 = vpack.c.b16 %v709, %v708
    %v715 = vsel %vm243, %v690, 0
    %717 = vmatprep.subr.bf16.mxu0 0
    %718 = vmatpush1.bf16.msra.mxu0 %v710
    %719 = vmatprep.subr.bf16.mxu0 0
    %720 = vmatpush1.bf16.msra.mxu0 %v711
    %721 = vmatprep.subr.bf16.mxu0 0
    %722 = vmatpush1.bf16.msra.mxu0 0
    %723 = vmatprep.subr.bf16.mxu0 0
    %724 = vmatpush1.bf16.msra.mxu0 0
    %725 = vmatprep.subr.bf16.mxu0 0
    %726 = vmatpush1.bf16.msra.mxu0 0
    %727 = vmatprep.subr.bf16.mxu0 0
    %728 = vmatpush1.bf16.msra.mxu0 0
    %729 = vmatprep.subr.bf16.mxu0 0
    %730 = vmatpush1.bf16.msra.mxu0 0
    %731 = vmatprep.subr.bf16.mxu0 0
    %732 = vmatpush1.bf16.msra.mxu0 0
    %733 = vmatprep.subr.bf16.mxu0 0
    %734 = vmatpush1.bf16.msra.mxu0 0
    %735 = vmatprep.subr.bf16.mxu0 0
    %736 = vmatpush1.bf16.msra.mxu0 0
    %737 = vmatprep.subr.bf16.mxu0 0
    %738 = vmatpush1.bf16.msra.mxu0 0
    %739 = vmatprep.subr.bf16.mxu0 0
    %740 = vmatpush1.bf16.msra.mxu0 0
    %741 = vmatprep.subr.bf16.mxu0 0
    %742 = vmatpush1.bf16.msra.mxu0 0
    %743 = vmatprep.subr.bf16.mxu0 0
    %744 = vmatpush1.bf16.msra.mxu0 0
    %745 = vmatprep.subr.bf16.mxu0 0
    %746 = vmatpush1.bf16.msra.mxu0 0
    %747 = vmatprep.subr.bf16.mxu0 0
    %748 = vmatpush1.bf16.msra.mxu0 0
    %749 = vmatprep.mubr.bf16.mxu0 0
    %750 = vmatmul.mubr.bf16.gmra.mrb[0].mxu0 %v715
    %v751 = vpop.f32.mrb[0].mxu0
    %v752 = vadd.f32 %v700, %v751
    %v753 = vpop.f32.mrb[0].mxu0
    %v754 = vpop.f32.mrb[0].mxu0
    %v755 = vadd.f32 %v700, %v754
    %v756 = vpop.f32.mrb[0].mxu0
    %757 = vdwg.mxu0
    %v758 = vld [vmem:[%s10] sm:$0x1]
    %v760 = vlaneseq
    %v761 = vshrl.u32 %v760, 7
    %v762 = vsub.s32 0, %v761
    %v763 = vrot.slane %v758, %v762
    %v765 = vmul.f32 %v752, %v763
    %v766 = vmul.f32 %v755, %v763
    %v767 = vadd.f32 %v227, %v765
    %v768 = vadd.f32 %v230, %v766
    %v769 = vld [vmem:[%s11] sm:$0x1]
    %v770 = vld [vmem:[%s12] sm:$0x1]
    %v771 = vsel %vm243, %v767, 0.0
    %772 = vadd.xlane.f32.xlu0 %v771
    %v773 = vpop.xlane.xlu0 %772
    %v774 = vsel %vm243, %v768, 0.0
    %775 = vadd.xlane.f32.xlu0 %v774
    %v776 = vpop.xlane.xlu0 %775
    %v777 = vmul.f32 %v773, %v250
    %v778 = vmul.f32 %v776, %v250
    %v779 = vsub.f32 %v767, %v777
    %v780 = vsub.f32 %v768, %v778
    %v781 = vmul.f32 %v779, %v779
    %v782 = vmul.f32 %v780, %v780
    %v783 = vsel %vm243, %v781, 0.0
    %784 = vadd.xlane.f32.xlu0 %v783
    %v785 = vpop.xlane.xlu0 %784
    %v786 = vsel %vm243, %v782, 0.0
    %787 = vadd.xlane.f32.xlu0 %v786
    %v788 = vpop.xlane.xlu0 %787
    %v789 = vmul.f32 %v785, %v250
    %v790 = vmul.f32 %v788, %v250
    %v791 = vadd.f32 %v789, 1e-06
    %v792 = vadd.f32 %v790, 1e-06
    %v793 = vrsqrt.pop %v791
    %v794 = vrsqrt.pop %v792
    %v795 = vmul.f32 %v779, %v793
    %v796 = vmul.f32 %v780, %v794
    %v798 = vlaneseq
    %v799 = vshrl.u32 %v798, 7
    %v800 = vsub.s32 0, %v799
    %v801 = vrot.slane %v769, %v800
    %v803 = vmul.f32 %v795, %v801
    %v804 = vmul.f32 %v796, %v801
    %v806 = vlaneseq
    %v807 = vshrl.u32 %v806, 7
    %v808 = vsub.s32 0, %v807
    %v809 = vrot.slane %v770, %v808
    %v811 = vadd.f32 %v803, %v809
    %v812 = vadd.f32 %v804, %v809
    %v813 = vpack.c.bf16 %v812, %v811
    %v814 = vld [vmem:[%s13] sm:$0xf]
    %v815 = vld [vmem:[%s13 + $0x4] sm:$0xf]
    %v816 = vld [vmem:[%s13 + $0x8] sm:$0xf]
    %v817 = vld [vmem:[%s13 + $0xc] sm:$0xf]
    %v818 = vld [vmem:[%s14] sm:$0x1]
    %v820 = vlaneseq
    %v821 = vshrl.u32 %v820, 7
    %v822 = vsub.s32 0, %v821
    %v823 = vrot.slane %v818, %v822
    %v829 = vunpack.c.l.b16 %v814
    %v830 = vunpack.c.l.b16 %v815
    %v831 = vunpack.c.l.b16 %v816
    %v832 = vunpack.c.l.b16 %v817
    %v833 = vpack.c.b16 %v830, %v829
    %v834 = vpack.c.b16 %v832, %v831
    %v838 = vsel %vm243, %v813, 0
    %840 = vmatprep.subr.bf16.mxu0 0
    %841 = vmatpush1.bf16.msra.mxu0 %v833
    %842 = vmatprep.subr.bf16.mxu0 0
    %843 = vmatpush1.bf16.msra.mxu0 %v834
    %844 = vmatprep.subr.bf16.mxu0 0
    %845 = vmatpush1.bf16.msra.mxu0 0
    %846 = vmatprep.subr.bf16.mxu0 0
    %847 = vmatpush1.bf16.msra.mxu0 0
    %848 = vmatprep.subr.bf16.mxu0 0
    %849 = vmatpush1.bf16.msra.mxu0 0
    %850 = vmatprep.subr.bf16.mxu0 0
    %851 = vmatpush1.bf16.msra.mxu0 0
    %852 = vmatprep.subr.bf16.mxu0 0
    %853 = vmatpush1.bf16.msra.mxu0 0
    %854 = vmatprep.subr.bf16.mxu0 0
    %855 = vmatpush1.bf16.msra.mxu0 0
    %856 = vmatprep.subr.bf16.mxu0 0
    %857 = vmatpush1.bf16.msra.mxu0 0
    %858 = vmatprep.subr.bf16.mxu0 0
    %859 = vmatpush1.bf16.msra.mxu0 0
    %860 = vmatprep.subr.bf16.mxu0 0
    %861 = vmatpush1.bf16.msra.mxu0 0
    %862 = vmatprep.subr.bf16.mxu0 0
    %863 = vmatpush1.bf16.msra.mxu0 0
    %864 = vmatprep.subr.bf16.mxu0 0
    %865 = vmatpush1.bf16.msra.mxu0 0
    %866 = vmatprep.subr.bf16.mxu0 0
    %867 = vmatpush1.bf16.msra.mxu0 0
    %868 = vmatprep.subr.bf16.mxu0 0
    %869 = vmatpush1.bf16.msra.mxu0 0
    %870 = vmatprep.subr.bf16.mxu0 0
    %871 = vmatpush1.bf16.msra.mxu0 0
    %872 = vmatprep.mubr.bf16.mxu0 0
    %873 = vmatmul.mubr.bf16.gmra.mrb[0].mxu0 %v838
    %v874 = vpop.f32.mrb[0].mxu0
    %v875 = vadd.f32 %v823, %v874
    %v876 = vpop.f32.mrb[0].mxu0
    %v877 = vpop.f32.mrb[0].mxu0
    %v878 = vadd.f32 %v823, %v877
    %v879 = vpop.f32.mrb[0].mxu0
    %880 = vdwg.mxu0
    %v881 = vmul.f32 %v875, %v875
    %v882 = vmul.f32 %v878, %v878
    %v883 = vmul.f32 %v875, %v881
    %v884 = vmul.f32 %v878, %v882
    %v885 = vmul.f32 %v883, 0.044715
    %v886 = vmul.f32 %v884, 0.044715
    %v887 = vadd.f32 %v875, %v885
    %v888 = vadd.f32 %v878, %v886
    %v889 = vmul.f32 %v887, 0.7978846
    %v890 = vmul.f32 %v888, 0.7978846
    %v891 = vtanh.pop %v889
    %v892 = vtanh.pop %v890
    %v893 = vadd.f32 %v891, 1.0
    %v894 = vadd.f32 %v892, 1.0
    %v895 = vmul.f32 %v893, 0.5
    %v896 = vmul.f32 %v894, 0.5
    %v897 = vmul.f32 %v875, %v895
    %v898 = vmul.f32 %v878, %v896
    %v899 = vpack.c.bf16 %v898, %v897
    %v900 = vld [vmem:[%s15] sm:$0xf]
    %v901 = vld [vmem:[%s15 + $0x4] sm:$0xf]
    %v902 = vld [vmem:[%s15 + $0x8] sm:$0xf]
    %v903 = vld [vmem:[%s15 + $0xc] sm:$0xf]
    %v904 = vld [vmem:[%s15 + $0x10] sm:$0xf]
    %v905 = vld [vmem:[%s15 + $0x14] sm:$0xf]
    %v906 = vld [vmem:[%s15 + $0x18] sm:$0xf]
    %v907 = vld [vmem:[%s15 + $0x1c] sm:$0xf]
    %v908 = vld [vmem:[%s15 + $0x20] sm:$0xf]
    %v909 = vld [vmem:[%s15 + $0x24] sm:$0xf]
    %v910 = vld [vmem:[%s15 + $0x28] sm:$0xf]
    %v911 = vld [vmem:[%s15 + $0x2c] sm:$0xf]
    %v912 = vld [vmem:[%s15 + $0x30] sm:$0xf]
    %v913 = vld [vmem:[%s15 + $0x34] sm:$0xf]
    %v914 = vld [vmem:[%s15 + $0x38] sm:$0xf]
    %v915 = vld [vmem:[%s15 + $0x3c] sm:$0xf]
    %v916 = vld [vmem:[%s16] sm:$0x1]
    %v918 = vlaneseq
    %v919 = vshrl.u32 %v918, 7
    %v920 = vsub.s32 0, %v919
    %v921 = vrot.slane %v916, %v920
    %v939 = vunpack.c.l.b16 %v900
    %v940 = vunpack.c.l.b16 %v901
    %v941 = vunpack.c.l.b16 %v902
    %v942 = vunpack.c.l.b16 %v903
    %v943 = vunpack.c.l.b16 %v904
    %v944 = vunpack.c.l.b16 %v905
    %v945 = vunpack.c.l.b16 %v906
    %v946 = vunpack.c.l.b16 %v907
    %v947 = vunpack.c.l.b16 %v908
    %v948 = vunpack.c.l.b16 %v909
    %v949 = vunpack.c.l.b16 %v910
    %v950 = vunpack.c.l.b16 %v911
    %v951 = vunpack.c.l.b16 %v912
    %v952 = vunpack.c.l.b16 %v913
    %v953 = vunpack.c.l.b16 %v914
    %v954 = vunpack.c.l.b16 %v915
    %v955 = vpack.c.b16 %v940, %v939
    %v956 = vpack.c.b16 %v942, %v941
    %v957 = vpack.c.b16 %v944, %v943
    %v958 = vpack.c.b16 %v946, %v945
    %v959 = vpack.c.b16 %v948, %v947
    %v960 = vpack.c.b16 %v950, %v949
    %v961 = vpack.c.b16 %v952, %v951
    %v962 = vpack.c.b16 %v954, %v953
    %971 = vmatprep.subr.bf16.mxu0 0
    %972 = vmatpush1.bf16.msra.mxu0 %v955
    %973 = vmatprep.subr.bf16.mxu0 0
    %974 = vmatpush1.bf16.msra.mxu0 %v956
    %975 = vmatprep.subr.bf16.mxu0 0
    %976 = vmatpush1.bf16.msra.mxu0 %v957
    %977 = vmatprep.subr.bf16.mxu0 0
    %978 = vmatpush1.bf16.msra.mxu0 %v958
    %979 = vmatprep.subr.bf16.mxu0 0
    %980 = vmatpush1.bf16.msra.mxu0 %v959
    %981 = vmatprep.subr.bf16.mxu0 0
    %982 = vmatpush1.bf16.msra.mxu0 %v960
    %983 = vmatprep.subr.bf16.mxu0 0
    %984 = vmatpush1.bf16.msra.mxu0 %v961
    %985 = vmatprep.subr.bf16.mxu0 0
    %986 = vmatpush1.bf16.msra.mxu0 %v962
    %987 = vmatprep.subr.bf16.mxu0 0
    %988 = vmatpush1.bf16.msra.mxu0 0
    %989 = vmatprep.subr.bf16.mxu0 0
    %990 = vmatpush1.bf16.msra.mxu0 0
    %991 = vmatprep.subr.bf16.mxu0 0
    %992 = vmatpush1.bf16.msra.mxu0 0
    %993 = vmatprep.subr.bf16.mxu0 0
    %994 = vmatpush1.bf16.msra.mxu0 0
    %995 = vmatprep.subr.bf16.mxu0 0
    %996 = vmatpush1.bf16.msra.mxu0 0
    %997 = vmatprep.subr.bf16.mxu0 0
    %998 = vmatpush1.bf16.msra.mxu0 0
    %999 = vmatprep.subr.bf16.mxu0 0
    %1000 = vmatpush1.bf16.msra.mxu0 0
    %1001 = vmatprep.subr.bf16.mxu0 0
    %1002 = vmatpush1.bf16.msra.mxu0 0
    %1003 = vmatprep.mubr.bf16.mxu0 0
    %1004 = vmatmul.mubr.bf16.gmra.mrb[0].mxu0 %v899
    %v1005 = vpop.f32.mrb[0].mxu0
    %v1006 = vadd.f32 %v921, %v1005
    %v1007 = vpop.f32.mrb[0].mxu0
    %v1008 = vpop.f32.mrb[0].mxu0
    %v1009 = vadd.f32 %v921, %v1008
    %v1010 = vpop.f32.mrb[0].mxu0
    %1011 = vdwg.mxu0
    %v1012 = vld [vmem:[%s17] sm:$0x1]
    %v1014 = vlaneseq
    %v1015 = vshrl.u32 %v1014, 7
    %v1016 = vsub.s32 0, %v1015
    %v1017 = vrot.slane %v1012, %v1016
    %v1019 = vmul.f32 %v1006, %v1017
    %v1020 = vmul.f32 %v1009, %v1017
    %v1021 = vadd.f32 %v767, %v1019
    %v1022 = vadd.f32 %v768, %v1020
    %s1023 = scalar_lea.vmem %s4, 1
    %v1024 = vld [vmem:[%s1023] sm:$0x1]
    %s1025 = scalar_lea.vmem %s5, 1
    %v1026 = vld [vmem:[%s1025] sm:$0x1]
    %v1027 = vsel %vm243, %v1021, 0.0
    %1028 = vadd.xlane.f32.xlu0 %v1027
    %v1029 = vpop.xlane.xlu0 %1028
    %v1030 = vsel %vm243, %v1022, 0.0
    %1031 = vadd.xlane.f32.xlu0 %v1030
    %v1032 = vpop.xlane.xlu0 %1031
    %v1033 = vmul.f32 %v1029, %v250
    %v1034 = vmul.f32 %v1032, %v250
    %v1035 = vsub.f32 %v1021, %v1033
    %v1036 = vsub.f32 %v1022, %v1034
    %v1037 = vmul.f32 %v1035, %v1035
    %v1038 = vmul.f32 %v1036, %v1036
    %v1039 = vsel %vm243, %v1037, 0.0
    %1040 = vadd.xlane.f32.xlu0 %v1039
    %v1041 = vpop.xlane.xlu0 %1040
    %v1042 = vsel %vm243, %v1038, 0.0
    %1043 = vadd.xlane.f32.xlu0 %v1042
    %v1044 = vpop.xlane.xlu0 %1043
    %v1045 = vmul.f32 %v1041, %v250
    %v1046 = vmul.f32 %v1044, %v250
    %v1047 = vadd.f32 %v1045, 1e-06
    %v1048 = vadd.f32 %v1046, 1e-06
    %v1049 = vrsqrt.pop %v1047
    %v1050 = vrsqrt.pop %v1048
    %v1051 = vmul.f32 %v1035, %v1049
    %v1052 = vmul.f32 %v1036, %v1050
    %v1054 = vlaneseq
    %v1055 = vshrl.u32 %v1054, 7
    %v1056 = vsub.s32 0, %v1055
    %v1057 = vrot.slane %v1024, %v1056
    %v1059 = vmul.f32 %v1051, %v1057
    %v1060 = vmul.f32 %v1052, %v1057
    %v1062 = vlaneseq
    %v1063 = vshrl.u32 %v1062, 7
    %v1064 = vsub.s32 0, %v1063
    %v1065 = vrot.slane %v1026, %v1064
    %v1067 = vadd.f32 %v1059, %v1065
    %v1068 = vadd.f32 %v1060, %v1065
    %v1069 = vpack.c.bf16 %v1068, %v1067
    %s1070 = scalar_lea.vmem %s6, 16
    %v1071 = vld [vmem:[%s1070] sm:$0xf]
    %v1072 = vld [vmem:[%s1070 + $0x4] sm:$0xf]
    %v1073 = vld [vmem:[%s1070 + $0x8] sm:$0xf]
    %v1074 = vld [vmem:[%s1070 + $0xc] sm:$0xf]
    %s1075 = scalar_lea.vmem %s7, 1
    %v1076 = vld [vmem:[%s1075] sm:$0x1]
    %v1078 = vlaneseq
    %v1079 = vshrl.u32 %v1078, 7
    %v1080 = vsub.s32 0, %v1079
    %v1081 = vrot.slane %v1076, %v1080
    %v1087 = vunpack.c.l.b16 %v1071
    %v1088 = vunpack.c.l.b16 %v1072
    %v1089 = vunpack.c.l.b16 %v1073
    %v1090 = vunpack.c.l.b16 %v1074
    %v1091 = vpack.c.b16 %v1088, %v1087
    %v1092 = vpack.c.b16 %v1090, %v1089
    %v1096 = vsel %vm243, %v1069, 0
    %1098 = vmatprep.subr.bf16.mxu0 0
    %1099 = vmatpush1.bf16.msra.mxu0 %v1091
    %1100 = vmatprep.subr.bf16.mxu0 0
    %1101 = vmatpush1.bf16.msra.mxu0 %v1092
    %1102 = vmatprep.subr.bf16.mxu0 0
    %1103 = vmatpush1.bf16.msra.mxu0 0
    %1104 = vmatprep.subr.bf16.mxu0 0
    %1105 = vmatpush1.bf16.msra.mxu0 0
    %1106 = vmatprep.subr.bf16.mxu0 0
    %1107 = vmatpush1.bf16.msra.mxu0 0
    %1108 = vmatprep.subr.bf16.mxu0 0
    %1109 = vmatpush1.bf16.msra.mxu0 0
    %1110 = vmatprep.subr.bf16.mxu0 0
    %1111 = vmatpush1.bf16.msra.mxu0 0
    %1112 = vmatprep.subr.bf16.mxu0 0
    %1113 = vmatpush1.bf16.msra.mxu0 0
    %1114 = vmatprep.subr.bf16.mxu0 0
    %1115 = vmatpush1.bf16.msra.mxu0 0
    %1116 = vmatprep.subr.bf16.mxu0 0
    %1117 = vmatpush1.bf16.msra.mxu0 0
    %1118 = vmatprep.subr.bf16.mxu0 0
    %1119 = vmatpush1.bf16.msra.mxu0 0
    %1120 = vmatprep.subr.bf16.mxu0 0
    %1121 = vmatpush1.bf16.msra.mxu0 0
    %1122 = vmatprep.subr.bf16.mxu0 0
    %1123 = vmatpush1.bf16.msra.mxu0 0
    %1124 = vmatprep.subr.bf16.mxu0 0
    %1125 = vmatpush1.bf16.msra.mxu0 0
    %1126 = vmatprep.subr.bf16.mxu0 0
    %1127 = vmatpush1.bf16.msra.mxu0 0
    %1128 = vmatprep.subr.bf16.mxu0 0
    %1129 = vmatpush1.bf16.msra.mxu0 0
    %1130 = vmatprep.mubr.bf16.mxu0 0
    %1131 = vmatmul.mubr.bf16.gmra.mrb[0].mxu0 %v1096
    %v1132 = vpop.f32.mrb[0].mxu0
    %v1133 = vadd.f32 %v1081, %v1132
    %v1134 = vpop.f32.mrb[0].mxu0
    %v1135 = vpop.f32.mrb[0].mxu0
    %v1136 = vadd.f32 %v1081, %v1135
    %v1137 = vpop.f32.mrb[0].mxu0
    %1138 = vdwg.mxu0
    %v1139 = vpack.c.bf16 %v1136, %v1133
    %1141 = vrot.lane.b32.xlu0 %v1139, 120
    %v1142 = vpop.permute.xlu0 %1141
    %1143 = vrot.lane.b32.xlu0 %v1139, 112
    %v1144 = vpop.permute.xlu0 %1143
    %1145 = vrot.lane.b32.xlu0 %v1139, 104
    %v1146 = vpop.permute.xlu0 %1145
    %1147 = vrot.lane.b32.xlu0 %v1139, 96
    %v1148 = vpop.permute.xlu0 %1147
    %1149 = vrot.lane.b32.xlu0 %v1142, 96
    %v1150 = vpop.permute.xlu0 %1149
    %1151 = vrot.lane.b32.xlu0 %v1144, 96
    %v1152 = vpop.permute.xlu0 %1151
    %1153 = vrot.lane.b32.xlu0 %v1146, 96
    %v1154 = vpop.permute.xlu0 %1153
    %v1156 = vsel %vm371, %v1139, 0
    %v1159 = vsel %vm371, %v1142, 0
    %v1162 = vsel %vm371, %v1144, 0
    %v1165 = vsel %vm371, %v1146, 0
    %v1168 = vsel %vm371, %v1148, 0
    %v1171 = vsel %vm371, %v1150, 0
    %v1174 = vsel %vm371, %v1152, 0
    %v1177 = vsel %vm371, %v1154, 0
    %1179 = vmatprep.subr.bf16.mxu0 0
    %1180 = vmatpush1.bf16.xpose.msra.mxu0 %v1168
    %1181 = vmatprep.subr.bf16.mxu0 0
    %1182 = vmatpush1.bf16.xpose.msra.mxu0 %v1171
    %1183 = vmatprep.subr.bf16.mxu0 0
    %1184 = vmatpush1.bf16.xpose.msra.mxu0 %v1174
    %1185 = vmatprep.subr.bf16.mxu0 0
    %1186 = vmatpush1.bf16.xpose.msra.mxu0 %v1177
    %1187 = vmatprep.subr.bf16.mxu0 0
    %1188 = vmatpush1.bf16.xpose.msra.mxu0 0
    %1189 = vmatprep.subr.bf16.mxu0 0
    %1190 = vmatpush1.bf16.xpose.msra.mxu0 0
    %1191 = vmatprep.subr.bf16.mxu0 0
    %1192 = vmatpush1.bf16.xpose.msra.mxu0 0
    %1193 = vmatprep.subr.bf16.mxu0 0
    %1194 = vmatpush1.bf16.xpose.msra.mxu0 0
    %1195 = vmatprep.subr.bf16.mxu0 0
    %1196 = vmatpush1.bf16.xpose.msra.mxu0 0
    %1197 = vmatprep.subr.bf16.mxu0 0
    %1198 = vmatpush1.bf16.xpose.msra.mxu0 0
    %1199 = vmatprep.subr.bf16.mxu0 0
    %1200 = vmatpush1.bf16.xpose.msra.mxu0 0
    %1201 = vmatprep.subr.bf16.mxu0 0
    %1202 = vmatpush1.bf16.xpose.msra.mxu0 0
    %1203 = vmatprep.subr.bf16.mxu0 0
    %1204 = vmatpush1.bf16.xpose.msra.mxu0 0
    %1205 = vmatprep.subr.bf16.mxu0 0
    %1206 = vmatpush1.bf16.xpose.msra.mxu0 0
    %1207 = vmatprep.subr.bf16.mxu0 0
    %1208 = vmatpush1.bf16.xpose.msra.mxu0 0
    %1209 = vmatprep.subr.bf16.mxu0 0
    %1210 = vmatpush1.bf16.xpose.msra.mxu0 0
    %1211 = vmatprep.mubr.bf16.mxu0 0
    %1212 = vmatmul.mubr.bf16.gmra.mrb[0].mxu0 %v1156
    %v1213 = vpop.f32.mrb[0].mxu0
    %v1214 = vadd.f32 0.0, %v1213
    %v1215 = vpop.f32.mrb[0].mxu0
    %v1216 = vpop.f32.mrb[0].mxu0
    %v1217 = vadd.f32 0.0, %v1216
    %v1218 = vpop.f32.mrb[0].mxu0
    %1219 = vmatprep.mubr.bf16.mxu0 0
    %1220 = vmatmul.mubr.bf16.gmra.mrb[0].mxu0 %v1159
    %v1221 = vpop.f32.mrb[0].mxu0
    %v1222 = vadd.f32 0.0, %v1221
    %v1223 = vpop.f32.mrb[0].mxu0
    %v1224 = vpop.f32.mrb[0].mxu0
    %v1225 = vadd.f32 0.0, %v1224
    %v1226 = vpop.f32.mrb[0].mxu0
    %1227 = vmatprep.mubr.bf16.mxu0 0
    %1228 = vmatmul.mubr.bf16.gmra.mrb[0].mxu0 %v1162
    %v1229 = vpop.f32.mrb[0].mxu0
    %v1230 = vadd.f32 0.0, %v1229
    %v1231 = vpop.f32.mrb[0].mxu0
    %v1232 = vpop.f32.mrb[0].mxu0
    %v1233 = vadd.f32 0.0, %v1232
    %v1234 = vpop.f32.mrb[0].mxu0
    %1235 = vmatprep.mubr.bf16.mxu0 0
    %1236 = vmatmul.mubr.bf16.gmra.mrb[0].mxu0 %v1165
    %v1237 = vpop.f32.mrb[0].mxu0
    %v1238 = vadd.f32 0.0, %v1237
    %v1239 = vpop.f32.mrb[0].mxu0
    %v1240 = vpop.f32.mrb[0].mxu0
    %v1241 = vadd.f32 0.0, %v1240
    %v1242 = vpop.f32.mrb[0].mxu0
    %1243 = vdwg.mxu0
    %v1244 = vmul.f32 %v1214, 0.35355338
    %v1245 = vmul.f32 %v1217, 0.35355338
    %v1246 = vmul.f32 %v1222, 0.35355338
    %v1247 = vmul.f32 %v1225, 0.35355338
    %v1248 = vmul.f32 %v1230, 0.35355338
    %v1249 = vmul.f32 %v1233, 0.35355338
    %v1250 = vmul.f32 %v1238, 0.35355338
    %v1251 = vmul.f32 %v1241, 0.35355338
    %v1252 = vadd.f32 %v1244, %v233
    %v1253 = vadd.f32 %v1245, %v234
    %v1254 = vadd.f32 %v1246, %v235
    %v1255 = vadd.f32 %v1247, %v236
    %v1256 = vadd.f32 %v1248, %v237
    %v1257 = vadd.f32 %v1249, %v238
    %v1258 = vadd.f32 %v1250, %v239
    %v1259 = vadd.f32 %v1251, %v240
    %v1260 = vsel %vm188, %v1252, -inf
    %1261 = vmax.xlane.f32.xlu0 %v1260
    %v1262 = vpop.xlane.xlu0 %1261
    %v1263 = vsel %vm188, %v1253, -inf
    %1264 = vmax.xlane.f32.xlu0 %v1263
    %v1265 = vpop.xlane.xlu0 %1264
    %v1266 = vsel %vm188, %v1254, -inf
    %1267 = vmax.xlane.f32.xlu0 %v1266
    %v1268 = vpop.xlane.xlu0 %1267
    %v1269 = vsel %vm188, %v1255, -inf
    %1270 = vmax.xlane.f32.xlu0 %v1269
    %v1271 = vpop.xlane.xlu0 %1270
    %v1272 = vsel %vm188, %v1256, -inf
    %1273 = vmax.xlane.f32.xlu0 %v1272
    %v1274 = vpop.xlane.xlu0 %1273
    %v1275 = vsel %vm188, %v1257, -inf
    %1276 = vmax.xlane.f32.xlu0 %v1275
    %v1277 = vpop.xlane.xlu0 %1276
    %v1278 = vsel %vm188, %v1258, -inf
    %1279 = vmax.xlane.f32.xlu0 %v1278
    %v1280 = vpop.xlane.xlu0 %1279
    %v1281 = vsel %vm188, %v1259, -inf
    %1282 = vmax.xlane.f32.xlu0 %v1281
    %v1283 = vpop.xlane.xlu0 %1282
    %v1284 = vsub.f32 %v1252, %v1262
    %v1285 = vsub.f32 %v1253, %v1265
    %v1286 = vsub.f32 %v1254, %v1268
    %v1287 = vsub.f32 %v1255, %v1271
    %v1288 = vsub.f32 %v1256, %v1274
    %v1289 = vsub.f32 %v1257, %v1277
    %v1290 = vsub.f32 %v1258, %v1280
    %v1291 = vsub.f32 %v1259, %v1283
    %v1292 = vmul.f32 %v1284, 1.442695
    %v1293 = vpow.pop %v1292
    %v1294 = vmul.f32 %v1285, 1.442695
    %v1295 = vpow.pop %v1294
    %v1296 = vmul.f32 %v1286, 1.442695
    %v1297 = vpow.pop %v1296
    %v1298 = vmul.f32 %v1287, 1.442695
    %v1299 = vpow.pop %v1298
    %v1300 = vmul.f32 %v1288, 1.442695
    %v1301 = vpow.pop %v1300
    %v1302 = vmul.f32 %v1289, 1.442695
    %v1303 = vpow.pop %v1302
    %v1304 = vmul.f32 %v1290, 1.442695
    %v1305 = vpow.pop %v1304
    %v1306 = vmul.f32 %v1291, 1.442695
    %v1307 = vpow.pop %v1306
    %v1308 = vsel %vm188, %v1293, 0.0
    %1309 = vadd.xlane.f32.xlu0 %v1308
    %v1310 = vpop.xlane.xlu0 %1309
    %v1311 = vsel %vm188, %v1295, 0.0
    %1312 = vadd.xlane.f32.xlu0 %v1311
    %v1313 = vpop.xlane.xlu0 %1312
    %v1314 = vsel %vm188, %v1297, 0.0
    %1315 = vadd.xlane.f32.xlu0 %v1314
    %v1316 = vpop.xlane.xlu0 %1315
    %v1317 = vsel %vm188, %v1299, 0.0
    %1318 = vadd.xlane.f32.xlu0 %v1317
    %v1319 = vpop.xlane.xlu0 %1318
    %v1320 = vsel %vm188, %v1301, 0.0
    %1321 = vadd.xlane.f32.xlu0 %v1320
    %v1322 = vpop.xlane.xlu0 %1321
    %v1323 = vsel %vm188, %v1303, 0.0
    %1324 = vadd.xlane.f32.xlu0 %v1323
    %v1325 = vpop.xlane.xlu0 %1324
    %v1326 = vsel %vm188, %v1305, 0.0
    %1327 = vadd.xlane.f32.xlu0 %v1326
    %v1328 = vpop.xlane.xlu0 %1327
    %v1329 = vsel %vm188, %v1307, 0.0
    %1330 = vadd.xlane.f32.xlu0 %v1329
    %v1331 = vpop.xlane.xlu0 %1330
    %v1332 = vrcp.pop %v1310
    %v1333 = vrcp.pop %v1313
    %v1334 = vrcp.pop %v1316
    %v1335 = vrcp.pop %v1319
    %v1336 = vrcp.pop %v1322
    %v1337 = vrcp.pop %v1325
    %v1338 = vrcp.pop %v1328
    %v1339 = vrcp.pop %v1331
    %v1340 = vmul.f32 %v1293, %v1332
    %v1341 = vmul.f32 %v1295, %v1333
    %v1342 = vmul.f32 %v1297, %v1334
    %v1343 = vmul.f32 %v1299, %v1335
    %v1344 = vmul.f32 %v1301, %v1336
    %v1345 = vmul.f32 %v1303, %v1337
    %v1346 = vmul.f32 %v1305, %v1338
    %v1347 = vmul.f32 %v1307, %v1339
    %v1348 = vpack.c.bf16 %v1341, %v1340
    %v1349 = vpack.c.bf16 %v1343, %v1342
    %v1350 = vpack.c.bf16 %v1345, %v1344
    %v1351 = vpack.c.bf16 %v1347, %v1346
    %1352 = vrot.lane.b32.xlu0 %v1139, 64
    %v1353 = vpop.permute.xlu0 %1352
    %1354 = vrot.lane.b32.xlu0 %v1142, 64
    %v1355 = vpop.permute.xlu0 %1354
    %1356 = vrot.lane.b32.xlu0 %v1144, 64
    %v1357 = vpop.permute.xlu0 %1356
    %1358 = vrot.lane.b32.xlu0 %v1146, 64
    %v1359 = vpop.permute.xlu0 %1358
    %v1365 = vsel %vm188, %v1348, 0
    %v1368 = vsel %vm188, %v1349, 0
    %v1371 = vsel %vm188, %v1350, 0
    %v1374 = vsel %vm188, %v1351, 0
    %1376 = vmatprep.subr.bf16.mxu0 0
    %1377 = vmatpush1.bf16.msra.mxu0 %v1353
    %1378 = vmatprep.subr.bf16.mxu0 0
    %1379 = vmatpush1.bf16.msra.mxu0 %v1355
    %1380 = vmatprep.subr.bf16.mxu0 0
    %1381 = vmatpush1.bf16.msra.mxu0 %v1357
    %1382 = vmatprep.subr.bf16.mxu0 0
    %1383 = vmatpush1.bf16.msra.mxu0 %v1359
    %1384 = vmatprep.subr.bf16.mxu0 0
    %1385 = vmatpush1.bf16.msra.mxu0 0
    %1386 = vmatprep.subr.bf16.mxu0 0
    %1387 = vmatpush1.bf16.msra.mxu0 0
    %1388 = vmatprep.subr.bf16.mxu0 0
    %1389 = vmatpush1.bf16.msra.mxu0 0
    %1390 = vmatprep.subr.bf16.mxu0 0
    %1391 = vmatpush1.bf16.msra.mxu0 0
    %1392 = vmatprep.subr.bf16.mxu0 0
    %1393 = vmatpush1.bf16.msra.mxu0 0
    %1394 = vmatprep.subr.bf16.mxu0 0
    %1395 = vmatpush1.bf16.msra.mxu0 0
    %1396 = vmatprep.subr.bf16.mxu0 0
    %1397 = vmatpush1.bf16.msra.mxu0 0
    %1398 = vmatprep.subr.bf16.mxu0 0
    %1399 = vmatpush1.bf16.msra.mxu0 0
    %1400 = vmatprep.subr.bf16.mxu0 0
    %1401 = vmatpush1.bf16.msra.mxu0 0
    %1402 = vmatprep.subr.bf16.mxu0 0
    %1403 = vmatpush1.bf16.msra.mxu0 0
    %1404 = vmatprep.subr.bf16.mxu0 0
    %1405 = vmatpush1.bf16.msra.mxu0 0
    %1406 = vmatprep.subr.bf16.mxu0 0
    %1407 = vmatpush1.bf16.msra.mxu0 0
    %1408 = vmatprep.mubr.bf16.mxu0 0
    %1409 = vmatmul.mubr.bf16.gmra.mrb[0].mxu0 %v1365
    %v1410 = vpop.f32.mrb[0].mxu0
    %v1411 = vadd.f32 0.0, %v1410
    %v1412 = vpop.f32.mrb[0].mxu0
    %v1413 = vpop.f32.mrb[0].mxu0
    %v1414 = vadd.f32 0.0, %v1413
    %v1415 = vpop.f32.mrb[0].mxu0
    %1416 = vmatprep.mubr.bf16.mxu0 0
    %1417 = vmatmul.mubr.bf16.gmra.mrb[0].mxu0 %v1368
    %v1418 = vpop.f32.mrb[0].mxu0
    %v1419 = vadd.f32 0.0, %v1418
    %v1420 = vpop.f32.mrb[0].mxu0
    %v1421 = vpop.f32.mrb[0].mxu0
    %v1422 = vadd.f32 0.0, %v1421
    %v1423 = vpop.f32.mrb[0].mxu0
    %1424 = vmatprep.mubr.bf16.mxu0 0
    %1425 = vmatmul.mubr.bf16.gmra.mrb[0].mxu0 %v1371
    %v1426 = vpop.f32.mrb[0].mxu0
    %v1427 = vadd.f32 0.0, %v1426
    %v1428 = vpop.f32.mrb[0].mxu0
    %v1429 = vpop.f32.mrb[0].mxu0
    %v1430 = vadd.f32 0.0, %v1429
    %v1431 = vpop.f32.mrb[0].mxu0
    %1432 = vmatprep.mubr.bf16.mxu0 0
    %1433 = vmatmul.mubr.bf16.gmra.mrb[0].mxu0 %v1374
    %v1434 = vpop.f32.mrb[0].mxu0
    %v1435 = vadd.f32 0.0, %v1434
    %v1436 = vpop.f32.mrb[0].mxu0
    %v1437 = vpop.f32.mrb[0].mxu0
    %v1438 = vadd.f32 0.0, %v1437
    %v1439 = vpop.f32.mrb[0].mxu0
    %1440 = vdwg.mxu0
    %1443 = vrot.lane.b32.xlu0 %v1419, 8
    %v1444 = vpop.permute.xlu0 %1443
    %1445 = vrot.lane.b32.xlu0 %v1422, 8
    %v1446 = vpop.permute.xlu0 %1445
    %1451 = vrot.lane.b32.xlu0 %v1427, 16
    %v1452 = vpop.permute.xlu0 %1451
    %1453 = vrot.lane.b32.xlu0 %v1430, 16
    %v1454 = vpop.permute.xlu0 %1453
    %1459 = vrot.lane.b32.xlu0 %v1435, 24
    %v1460 = vpop.permute.xlu0 %1459
    %1461 = vrot.lane.b32.xlu0 %v1438, 24
    %v1462 = vpop.permute.xlu0 %1461
    %v1465 = vsel %vm371, %v1411, %v1444
    %v1466 = vsel %vm371, %v1414, %v1446
    %v1467 = vsel %vm684, %v1465, %v1452
    %v1468 = vsel %vm684, %v1466, %v1454
    %v1469 = vsel %vm687, %v1467, %v1460
    %v1470 = vsel %vm687, %v1468, %v1462
    %v1471 = vpack.c.bf16 %v1470, %v1469
    %s1472 = scalar_lea.vmem %s8, 16
    %v1473 = vld [vmem:[%s1472] sm:$0xf]
    %v1474 = vld [vmem:[%s1472 + $0x4] sm:$0xf]
    %v1475 = vld [vmem:[%s1472 + $0x8] sm:$0xf]
    %v1476 = vld [vmem:[%s1472 + $0xc] sm:$0xf]
    %s1477 = scalar_lea.vmem %s9, 1
    %v1478 = vld [vmem:[%s1477] sm:$0x1]
    %v1480 = vlaneseq
    %v1481 = vshrl.u32 %v1480, 7
    %v1482 = vsub.s32 0, %v1481
    %v1483 = vrot.slane %v1478, %v1482
    %v1489 = vunpack.c.l.b16 %v1473
    %v1490 = vunpack.c.l.b16 %v1474
    %v1491 = vunpack.c.l.b16 %v1475
    %v1492 = vunpack.c.l.b16 %v1476
    %v1493 = vpack.c.b16 %v1490, %v1489
    %v1494 = vpack.c.b16 %v1492, %v1491
    %v1498 = vsel %vm243, %v1471, 0
    %1500 = vmatprep.subr.bf16.mxu0 0
    %1501 = vmatpush1.bf16.msra.mxu0 %v1493
    %1502 = vmatprep.subr.bf16.mxu0 0
    %1503 = vmatpush1.bf16.msra.mxu0 %v1494
    %1504 = vmatprep.subr.bf16.mxu0 0
    %1505 = vmatpush1.bf16.msra.mxu0 0
    %1506 = vmatprep.subr.bf16.mxu0 0
    %1507 = vmatpush1.bf16.msra.mxu0 0
    %1508 = vmatprep.subr.bf16.mxu0 0
    %1509 = vmatpush1.bf16.msra.mxu0 0
    %1510 = vmatprep.subr.bf16.mxu0 0
    %1511 = vmatpush1.bf16.msra.mxu0 0
    %1512 = vmatprep.subr.bf16.mxu0 0
    %1513 = vmatpush1.bf16.msra.mxu0 0
    %1514 = vmatprep.subr.bf16.mxu0 0
    %1515 = vmatpush1.bf16.msra.mxu0 0
    %1516 = vmatprep.subr.bf16.mxu0 0
    %1517 = vmatpush1.bf16.msra.mxu0 0
    %1518 = vmatprep.subr.bf16.mxu0 0
    %1519 = vmatpush1.bf16.msra.mxu0 0
    %1520 = vmatprep.subr.bf16.mxu0 0
    %1521 = vmatpush1.bf16.msra.mxu0 0
    %1522 = vmatprep.subr.bf16.mxu0 0
    %1523 = vmatpush1.bf16.msra.mxu0 0
    %1524 = vmatprep.subr.bf16.mxu0 0
    %1525 = vmatpush1.bf16.msra.mxu0 0
    %1526 = vmatprep.subr.bf16.mxu0 0
    %1527 = vmatpush1.bf16.msra.mxu0 0
    %1528 = vmatprep.subr.bf16.mxu0 0
    %1529 = vmatpush1.bf16.msra.mxu0 0
    %1530 = vmatprep.subr.bf16.mxu0 0
    %1531 = vmatpush1.bf16.msra.mxu0 0
    %1532 = vmatprep.mubr.bf16.mxu0 0
    %1533 = vmatmul.mubr.bf16.gmra.mrb[0].mxu0 %v1498
    %v1534 = vpop.f32.mrb[0].mxu0
    %v1535 = vadd.f32 %v1483, %v1534
    %v1536 = vpop.f32.mrb[0].mxu0
    %v1537 = vpop.f32.mrb[0].mxu0
    %v1538 = vadd.f32 %v1483, %v1537
    %v1539 = vpop.f32.mrb[0].mxu0
    %1540 = vdwg.mxu0
    %s1541 = scalar_lea.vmem %s10, 1
    %v1542 = vld [vmem:[%s1541] sm:$0x1]
    %v1544 = vlaneseq
    %v1545 = vshrl.u32 %v1544, 7
    %v1546 = vsub.s32 0, %v1545
    %v1547 = vrot.slane %v1542, %v1546
    %v1549 = vmul.f32 %v1535, %v1547
    %v1550 = vmul.f32 %v1538, %v1547
    %v1551 = vadd.f32 %v1021, %v1549
    %v1552 = vadd.f32 %v1022, %v1550
    %s1553 = scalar_lea.vmem %s11, 1
    %v1554 = vld [vmem:[%s1553] sm:$0x1]
    %s1555 = scalar_lea.vmem %s12, 1
    %v1556 = vld [vmem:[%s1555] sm:$0x1]
    %v1557 = vsel %vm243, %v1551, 0.0
    %1558 = vadd.xlane.f32.xlu0 %v1557
    %v1559 = vpop.xlane.xlu0 %1558
    %v1560 = vsel %vm243, %v1552, 0.0
    %1561 = vadd.xlane.f32.xlu0 %v1560
    %v1562 = vpop.xlane.xlu0 %1561
    %v1563 = vmul.f32 %v1559, %v250
    %v1564 = vmul.f32 %v1562, %v250
    %v1565 = vsub.f32 %v1551, %v1563
    %v1566 = vsub.f32 %v1552, %v1564
    %v1567 = vmul.f32 %v1565, %v1565
    %v1568 = vmul.f32 %v1566, %v1566
    %v1569 = vsel %vm243, %v1567, 0.0
    %1570 = vadd.xlane.f32.xlu0 %v1569
    %v1571 = vpop.xlane.xlu0 %1570
    %v1572 = vsel %vm243, %v1568, 0.0
    %1573 = vadd.xlane.f32.xlu0 %v1572
    %v1574 = vpop.xlane.xlu0 %1573
    %v1575 = vmul.f32 %v1571, %v250
    %v1576 = vmul.f32 %v1574, %v250
    %v1577 = vadd.f32 %v1575, 1e-06
    %v1578 = vadd.f32 %v1576, 1e-06
    %v1579 = vrsqrt.pop %v1577
    %v1580 = vrsqrt.pop %v1578
    %v1581 = vmul.f32 %v1565, %v1579
    %v1582 = vmul.f32 %v1566, %v1580
    %v1584 = vlaneseq
    %v1585 = vshrl.u32 %v1584, 7
    %v1586 = vsub.s32 0, %v1585
    %v1587 = vrot.slane %v1554, %v1586
    %v1589 = vmul.f32 %v1581, %v1587
    %v1590 = vmul.f32 %v1582, %v1587
    %v1592 = vlaneseq
    %v1593 = vshrl.u32 %v1592, 7
    %v1594 = vsub.s32 0, %v1593
    %v1595 = vrot.slane %v1556, %v1594
    %v1597 = vadd.f32 %v1589, %v1595
    %v1598 = vadd.f32 %v1590, %v1595
    %v1599 = vpack.c.bf16 %v1598, %v1597
    %s1600 = scalar_lea.vmem %s13, 16
    %v1601 = vld [vmem:[%s1600] sm:$0xf]
    %v1602 = vld [vmem:[%s1600 + $0x4] sm:$0xf]
    %v1603 = vld [vmem:[%s1600 + $0x8] sm:$0xf]
    %v1604 = vld [vmem:[%s1600 + $0xc] sm:$0xf]
    %s1605 = scalar_lea.vmem %s14, 1
    %v1606 = vld [vmem:[%s1605] sm:$0x1]
    %v1608 = vlaneseq
    %v1609 = vshrl.u32 %v1608, 7
    %v1610 = vsub.s32 0, %v1609
    %v1611 = vrot.slane %v1606, %v1610
    %v1617 = vunpack.c.l.b16 %v1601
    %v1618 = vunpack.c.l.b16 %v1602
    %v1619 = vunpack.c.l.b16 %v1603
    %v1620 = vunpack.c.l.b16 %v1604
    %v1621 = vpack.c.b16 %v1618, %v1617
    %v1622 = vpack.c.b16 %v1620, %v1619
    %v1626 = vsel %vm243, %v1599, 0
    %1628 = vmatprep.subr.bf16.mxu0 0
    %1629 = vmatpush1.bf16.msra.mxu0 %v1621
    %1630 = vmatprep.subr.bf16.mxu0 0
    %1631 = vmatpush1.bf16.msra.mxu0 %v1622
    %1632 = vmatprep.subr.bf16.mxu0 0
    %1633 = vmatpush1.bf16.msra.mxu0 0
    %1634 = vmatprep.subr.bf16.mxu0 0
    %1635 = vmatpush1.bf16.msra.mxu0 0
    %1636 = vmatprep.subr.bf16.mxu0 0
    %1637 = vmatpush1.bf16.msra.mxu0 0
    %1638 = vmatprep.subr.bf16.mxu0 0
    %1639 = vmatpush1.bf16.msra.mxu0 0
    %1640 = vmatprep.subr.bf16.mxu0 0
    %1641 = vmatpush1.bf16.msra.mxu0 0
    %1642 = vmatprep.subr.bf16.mxu0 0
    %1643 = vmatpush1.bf16.msra.mxu0 0
    %1644 = vmatprep.subr.bf16.mxu0 0
    %1645 = vmatpush1.bf16.msra.mxu0 0
    %1646 = vmatprep.subr.bf16.mxu0 0
    %1647 = vmatpush1.bf16.msra.mxu0 0
    %1648 = vmatprep.subr.bf16.mxu0 0
    %1649 = vmatpush1.bf16.msra.mxu0 0
    %1650 = vmatprep.subr.bf16.mxu0 0
    %1651 = vmatpush1.bf16.msra.mxu0 0
    %1652 = vmatprep.subr.bf16.mxu0 0
    %1653 = vmatpush1.bf16.msra.mxu0 0
    %1654 = vmatprep.subr.bf16.mxu0 0
    %1655 = vmatpush1.bf16.msra.mxu0 0
    %1656 = vmatprep.subr.bf16.mxu0 0
    %1657 = vmatpush1.bf16.msra.mxu0 0
    %1658 = vmatprep.subr.bf16.mxu0 0
    %1659 = vmatpush1.bf16.msra.mxu0 0
    %1660 = vmatprep.mubr.bf16.mxu0 0
    %1661 = vmatmul.mubr.bf16.gmra.mrb[0].mxu0 %v1626
    %v1662 = vpop.f32.mrb[0].mxu0
    %v1663 = vadd.f32 %v1611, %v1662
    %v1664 = vpop.f32.mrb[0].mxu0
    %v1665 = vpop.f32.mrb[0].mxu0
    %v1666 = vadd.f32 %v1611, %v1665
    %v1667 = vpop.f32.mrb[0].mxu0
    %1668 = vdwg.mxu0
    %v1669 = vmul.f32 %v1663, %v1663
    %v1670 = vmul.f32 %v1666, %v1666
    %v1671 = vmul.f32 %v1663, %v1669
    %v1672 = vmul.f32 %v1666, %v1670
    %v1673 = vmul.f32 %v1671, 0.044715
    %v1674 = vmul.f32 %v1672, 0.044715
    %v1675 = vadd.f32 %v1663, %v1673
    %v1676 = vadd.f32 %v1666, %v1674
    %v1677 = vmul.f32 %v1675, 0.7978846
    %v1678 = vmul.f32 %v1676, 0.7978846
    %v1679 = vtanh.pop %v1677
    %v1680 = vtanh.pop %v1678
    %v1681 = vadd.f32 %v1679, 1.0
    %v1682 = vadd.f32 %v1680, 1.0
    %v1683 = vmul.f32 %v1681, 0.5
    %v1684 = vmul.f32 %v1682, 0.5
    %v1685 = vmul.f32 %v1663, %v1683
    %v1686 = vmul.f32 %v1666, %v1684
    %v1687 = vpack.c.bf16 %v1686, %v1685
    %s1688 = scalar_lea.vmem %s15, 64
    %v1689 = vld [vmem:[%s1688] sm:$0xf]
    %v1690 = vld [vmem:[%s1688 + $0x4] sm:$0xf]
    %v1691 = vld [vmem:[%s1688 + $0x8] sm:$0xf]
    %v1692 = vld [vmem:[%s1688 + $0xc] sm:$0xf]
    %v1693 = vld [vmem:[%s1688 + $0x10] sm:$0xf]
    %v1694 = vld [vmem:[%s1688 + $0x14] sm:$0xf]
    %v1695 = vld [vmem:[%s1688 + $0x18] sm:$0xf]
    %v1696 = vld [vmem:[%s1688 + $0x1c] sm:$0xf]
    %v1697 = vld [vmem:[%s1688 + $0x20] sm:$0xf]
    %v1698 = vld [vmem:[%s1688 + $0x24] sm:$0xf]
    %v1699 = vld [vmem:[%s1688 + $0x28] sm:$0xf]
    %v1700 = vld [vmem:[%s1688 + $0x2c] sm:$0xf]
    %v1701 = vld [vmem:[%s1688 + $0x30] sm:$0xf]
    %v1702 = vld [vmem:[%s1688 + $0x34] sm:$0xf]
    %v1703 = vld [vmem:[%s1688 + $0x38] sm:$0xf]
    %v1704 = vld [vmem:[%s1688 + $0x3c] sm:$0xf]
    %s1705 = scalar_lea.vmem %s16, 1
    %v1706 = vld [vmem:[%s1705] sm:$0x1]
    %v1708 = vlaneseq
    %v1709 = vshrl.u32 %v1708, 7
    %v1710 = vsub.s32 0, %v1709
    %v1711 = vrot.slane %v1706, %v1710
    %v1729 = vunpack.c.l.b16 %v1689
    %v1730 = vunpack.c.l.b16 %v1690
    %v1731 = vunpack.c.l.b16 %v1691
    %v1732 = vunpack.c.l.b16 %v1692
    %v1733 = vunpack.c.l.b16 %v1693
    %v1734 = vunpack.c.l.b16 %v1694
    %v1735 = vunpack.c.l.b16 %v1695
    %v1736 = vunpack.c.l.b16 %v1696
    %v1737 = vunpack.c.l.b16 %v1697
    %v1738 = vunpack.c.l.b16 %v1698
    %v1739 = vunpack.c.l.b16 %v1699
    %v1740 = vunpack.c.l.b16 %v1700
    %v1741 = vunpack.c.l.b16 %v1701
    %v1742 = vunpack.c.l.b16 %v1702
    %v1743 = vunpack.c.l.b16 %v1703
    %v1744 = vunpack.c.l.b16 %v1704
    %v1745 = vpack.c.b16 %v1730, %v1729
    %v1746 = vpack.c.b16 %v1732, %v1731
    %v1747 = vpack.c.b16 %v1734, %v1733
    %v1748 = vpack.c.b16 %v1736, %v1735
    %v1749 = vpack.c.b16 %v1738, %v1737
    %v1750 = vpack.c.b16 %v1740, %v1739
    %v1751 = vpack.c.b16 %v1742, %v1741
    %v1752 = vpack.c.b16 %v1744, %v1743
    %1761 = vmatprep.subr.bf16.mxu0 0
    %1762 = vmatpush1.bf16.msra.mxu0 %v1745
    %1763 = vmatprep.subr.bf16.mxu0 0
    %1764 = vmatpush1.bf16.msra.mxu0 %v1746
    %1765 = vmatprep.subr.bf16.mxu0 0
    %1766 = vmatpush1.bf16.msra.mxu0 %v1747
    %1767 = vmatprep.subr.bf16.mxu0 0
    %1768 = vmatpush1.bf16.msra.mxu0 %v1748
    %1769 = vmatprep.subr.bf16.mxu0 0
    %1770 = vmatpush1.bf16.msra.mxu0 %v1749
    %1771 = vmatprep.subr.bf16.mxu0 0
    %1772 = vmatpush1.bf16.msra.mxu0 %v1750
    %1773 = vmatprep.subr.bf16.mxu0 0
    %1774 = vmatpush1.bf16.msra.mxu0 %v1751
    %1775 = vmatprep.subr.bf16.mxu0 0
    %1776 = vmatpush1.bf16.msra.mxu0 %v1752
    %1777 = vmatprep.subr.bf16.mxu0 0
    %1778 = vmatpush1.bf16.msra.mxu0 0
    %1779 = vmatprep.subr.bf16.mxu0 0
    %1780 = vmatpush1.bf16.msra.mxu0 0
    %1781 = vmatprep.subr.bf16.mxu0 0
    %1782 = vmatpush1.bf16.msra.mxu0 0
    %1783 = vmatprep.subr.bf16.mxu0 0
    %1784 = vmatpush1.bf16.msra.mxu0 0
    %1785 = vmatprep.subr.bf16.mxu0 0
    %1786 = vmatpush1.bf16.msra.mxu0 0
    %1787 = vmatprep.subr.bf16.mxu0 0
    %1788 = vmatpush1.bf16.msra.mxu0 0
    %1789 = vmatprep.subr.bf16.mxu0 0
    %1790 = vmatpush1.bf16.msra.mxu0 0
    %1791 = vmatprep.subr.bf16.mxu0 0
    %1792 = vmatpush1.bf16.msra.mxu0 0
    %1793 = vmatprep.mubr.bf16.mxu0 0
    %1794 = vmatmul.mubr.bf16.gmra.mrb[0].mxu0 %v1687
    %v1795 = vpop.f32.mrb[0].mxu0
    %v1796 = vadd.f32 %v1711, %v1795
    %v1797 = vpop.f32.mrb[0].mxu0
    %v1798 = vpop.f32.mrb[0].mxu0
    %v1799 = vadd.f32 %v1711, %v1798
    %v1800 = vpop.f32.mrb[0].mxu0
    %1801 = vdwg.mxu0
    %s1802 = scalar_lea.vmem %s17, 1
    %v1803 = vld [vmem:[%s1802] sm:$0x1]
    %v1805 = vlaneseq
    %v1806 = vshrl.u32 %v1805, 7
    %v1807 = vsub.s32 0, %v1806
    %v1808 = vrot.slane %v1803, %v1807
    %v1810 = vmul.f32 %v1796, %v1808
    %v1811 = vmul.f32 %v1799, %v1808
    %v1812 = vadd.f32 %v1551, %v1810
    %v1813 = vadd.f32 %v1552, %v1811
    %v1814 = vld [vmem:[%s18] sm:$0x1]
    %v1815 = vld [vmem:[%s19] sm:$0x1]
    %v1816 = vsel %vm243, %v1812, 0.0
    %1817 = vadd.xlane.f32.xlu0 %v1816
    %v1818 = vpop.xlane.xlu0 %1817
    %v1819 = vsel %vm243, %v1813, 0.0
    %1820 = vadd.xlane.f32.xlu0 %v1819
    %v1821 = vpop.xlane.xlu0 %1820
    %v1822 = vmul.f32 %v1818, %v250
    %v1823 = vmul.f32 %v1821, %v250
    %v1824 = vsub.f32 %v1812, %v1822
    %v1825 = vsub.f32 %v1813, %v1823
    %v1826 = vmul.f32 %v1824, %v1824
    %v1827 = vmul.f32 %v1825, %v1825
    %v1828 = vsel %vm243, %v1826, 0.0
    %1829 = vadd.xlane.f32.xlu0 %v1828
    %v1830 = vpop.xlane.xlu0 %1829
    %v1831 = vsel %vm243, %v1827, 0.0
    %1832 = vadd.xlane.f32.xlu0 %v1831
    %v1833 = vpop.xlane.xlu0 %1832
    %v1834 = vmul.f32 %v1830, %v250
    %v1835 = vmul.f32 %v1833, %v250
    %v1836 = vadd.f32 %v1834, 1e-06
    %v1837 = vadd.f32 %v1835, 1e-06
    %v1838 = vrsqrt.pop %v1836
    %v1839 = vrsqrt.pop %v1837
    %v1840 = vmul.f32 %v1824, %v1838
    %v1841 = vmul.f32 %v1825, %v1839
    %v1843 = vlaneseq
    %v1844 = vshrl.u32 %v1843, 7
    %v1845 = vsub.s32 0, %v1844
    %v1846 = vrot.slane %v1814, %v1845
    %v1848 = vmul.f32 %v1840, %v1846
    %v1849 = vmul.f32 %v1841, %v1846
    %v1851 = vlaneseq
    %v1852 = vshrl.u32 %v1851, 7
    %v1853 = vsub.s32 0, %v1852
    %v1854 = vrot.slane %v1815, %v1853
    %v1856 = vadd.f32 %v1848, %v1854
    %v1857 = vadd.f32 %v1849, %v1854
    %v1859 = vrot.slane %v1857, 7
    %vm1861 = vcmask 1040384
    %v1862 = vsel %vm1861, %v1856, %v1859
    %v1863 = vld [vmem:[%s20] sm:$0x1]
    %v1865 = vlaneseq
    %v1866 = vshrl.u32 %v1865, 7
    %v1867 = vsub.s32 0, %v1866
    %v1868 = vrot.slane %v1863, %v1867
    %v1870 = vmul.f32 %v1862, %v1868
    %vm1871 = vcmask 254976
    %v1872 = vsel %vm1871, %v1870, 0.0
    %1873 = vadd.xlane.f32.xlu0 %v1872
    %v1874 = vpop.xlane.xlu0 %1873
    %v1875 = vld [vmem:[%s21] sm:$0x7]
    %v1877 = vlaneseq
    %v1878 = vshrl.u32 %v1877, 7
    %v1879 = vsub.s32 0, %v1878
    %v1880 = vrot.slane %v1875, %v1879
    %v1881 = vlaneseq
    %v1882 = vshrl.u32 %v1881, 7
    %v1883 = vsub.s32 1, %v1882
    %v1884 = vrot.slane %v1875, %v1883
    %v1885 = vlaneseq
    %v1886 = vshrl.u32 %v1885, 7
    %v1887 = vsub.s32 2, %v1886
    %v1888 = vrot.slane %v1875, %v1887
    %v1892 = vadd.f32 %v1874, %v1880
    %v1893 = vadd.f32 %v1874, %v1884
    %v1894 = vadd.f32 %v1874, %v1888
    %v1898 = vcombine.low %v1892, %v1893
    %v1900 = vunpack.c.l.s4 1983009808
    %v1901 = vunpack.c.0.s8 %v1900
    %v1902 = vlaneseq
    %v1903 = vshrl.u32 %v1902, 7
    %v1904 = vsub.s32 %v1901, %v1903
    %v1905 = vrot.slane %v1898, %v1904
    %v1907 = vunpack.c.l.s4 1983009808
    %v1908 = vunpack.c.0.s8 %v1907
    %v1909 = vlaneseq
    %v1910 = vshrl.u32 %v1909, 7
    %v1911 = vsub.s32 %v1908, %v1910
    %v1912 = vrot.slane %v1894, %v1911
    %v1913 = vcombine.low %v1905, %v1912
    %1915 = vst [vmem:[#allocation2] sm:$0x3f] %v1913
    %v1916 = vld [vmem:[%s22] sm:$0x3]
    %v1917 = vlaneseq
    %v1918 = vand.u32 %v1917, 127
    %v1919 = vadd.s32 %v1918, 128
    %v1920 = vadd.s32 %v1918, 256
    %1921 = vset.pattern.permute.xlu0 0
    %1922 = vperm.xlu0 %1921, %v1916
    %v1923 = vpop.permute.xlu0 %1922
    %vm1924 = vcmp.lt.s32.totalorder %v1918, %v1923
    %vm1925 = vcmp.lt.s32.totalorder %v1919, %v1923
    %vm1926 = vcmp.lt.s32.totalorder %v1920, %v1923
    %v1927 = vsel %vm1924, 1, 0
    %v1928 = vsel %vm1925, 1, 0
    %v1929 = vsel %vm1926, 1, 0
    %v1930 = vcvt.s32.f32 %v1927
    %v1931 = vcvt.s32.f32 %v1928
    %v1932 = vcvt.s32.f32 %v1929
    %vm1933 = vcmp.lt.s32.totalorder %v1918, 299
    %vm1934 = vcmp.lt.s32.totalorder %v1919, 299
    %vm1935 = vcmp.lt.s32.totalorder %v1920, 299
    %v1936 = vsel %vm1933, 1, 0
    %v1937 = vsel %vm1934, 1, 0
    %v1938 = vsel %vm1935, 1, 0
    %v1939 = vcvt.s32.f32 %v1936
    %v1940 = vcvt.s32.f32 %v1937
    %v1941 = vcvt.s32.f32 %v1938
    %v1942 = vmin.f32 %v1892, 0.0
    %v1943 = vmin.f32 %v1893, 0.0
    %v1944 = vmin.f32 %v1894, 0.0
    %v1945 = vand.u32 2147483647, %v1892
    %v1946 = vand.u32 2147483647, %v1893
    %v1947 = vand.u32 2147483647, %v1894
    %v1948 = vsub.f32 0.0, %v1945
    %v1949 = vsub.f32 0.0, %v1946
    %v1950 = vsub.f32 0.0, %v1947
    %v1951 = vmul.f32 %v1948, 1.442695
    %v1952 = vpow.pop %v1951
    %v1953 = vmul.f32 %v1949, 1.442695
    %v1954 = vpow.pop %v1953
    %v1955 = vmul.f32 %v1950, 1.442695
    %v1956 = vpow.pop %v1955
    %v1957 = vadd.f32 %v1952, 1.0
    %v1958 = vadd.f32 %v1954, 1.0
    %v1959 = vadd.f32 %v1956, 1.0
    %v1960 = vlog2.pop %v1957
    %v1961 = vmul.f32 %v1960, 0.6931472
    %v1962 = vlog2.pop %v1958
    %v1963 = vmul.f32 %v1962, 0.6931472
    %v1964 = vlog2.pop %v1959
    %v1965 = vmul.f32 %v1964, 0.6931472
    %v1966 = vsub.f32 %v1942, %v1961
    %v1967 = vsub.f32 %v1943, %v1963
    %v1968 = vsub.f32 %v1944, %v1965
    %v1969 = vmul.f32 %v1966, %v1930
    %v1970 = vmul.f32 %v1967, %v1931
    %v1971 = vmul.f32 %v1968, %v1932
    %v1972 = vsub.f32 %v1966, %v1892
    %v1973 = vsub.f32 %v1967, %v1893
    %v1974 = vsub.f32 %v1968, %v1894
    %v1975 = vsub.f32 1.0, %v1930
    %v1976 = vsub.f32 1.0, %v1931
    %v1977 = vsub.f32 1.0, %v1932
    %v1978 = vmul.f32 %v1972, %v1975
    %v1979 = vmul.f32 %v1973, %v1976
    %v1980 = vmul.f32 %v1974, %v1977
    %v1981 = vadd.f32 %v1969, %v1978
    %v1982 = vadd.f32 %v1970, %v1979
    %v1983 = vadd.f32 %v1971, %v1980
    %v1984 = vmul.f32 %v1981, %v1939
    %v1985 = vmul.f32 %v1982, %v1940
    %v1986 = vmul.f32 %v1983, %v1941
    %vm1987 = vcmask 1041408
    %v1988 = vsel %vm1987, %v1984, 0.0
    %v1989 = vsel %vm1987, %v1985, 0.0
    %v1990 = vadd.f32 %v1988, %v1989
    %v1991 = vsel %vm1987, %v1986, 0.0
    %v1992 = vadd.f32 %v1990, %v1991
    %1993 = vadd.xlane.f32.xlu0 %v1992
    %v1994 = vpop.xlane.xlu0 %1993
    %v1995 = vsel %vm1987, %v1994, 0.0
    %v1996 = vrot.slane %v1995, 4
    %v1997 = vadd.f32 %v1995, %v1996
    %v1998 = vrot.slane %v1997, 2
    %v1999 = vadd.f32 %v1997, %v1998
    %v2000 = vrot.slane %v1999, 1
    %v2001 = vadd.f32 %v1999, %v2000
    %v2002 = vsub.f32 0.0, %v2001
    %v2003 = vmul.f32 %v2002, 0.5
    %vm2004 = vcmask 0
    %2005 = vst.msk [vmem:[#allocation4] sm:$0x1] %vm2004, %v2003
    // Predicated region
    $region94: #{dinov2_coral_forward.1} parent=1 // pred_check
      _
    $region95: #{dinov2_coral_forward.1} parent=1 // pred_check_branch
      %2007 = sbr.rel (0) target = $region97
    $region96: #{dinov2_coral_forward.1} parent=1 // pred_region
      %s2009 = ssub.s32 96, 96
      %2010 = vsyncadd [#allocation3], %s2009
      %s2012 = sshll.u32 [#allocation2], 4
      %s2013 = int_to_ptr.vmem [resolvable:$true] %s2012
      %2015 = dma.vmem_to_hbm [thread:$0]  %s2013, 96, %s23, [#allocation3]
    $region97: #{dinov2_coral_forward.1} parent=1 // pred_fallthru
      _
    // Predicated region
    $region98: #{dinov2_coral_forward.1} parent=1 // pred_check
      _
    $region99: #{dinov2_coral_forward.1} parent=1 // pred_check_branch
      %2017 = sbr.rel (0) target = $region101
    $region100: #{dinov2_coral_forward.1} parent=1 // pred_region
      %s2019 = ssub.s32 16, 16
      %2020 = vsyncadd [#allocation5], %s2019
      %s2022 = sshll.u32 [#allocation4], 4
      %s2023 = int_to_ptr.vmem [resolvable:$true] %s2022
      %2025 = dma.vmem_to_hbm [thread:$0]  %s2023, 16, %s24, [#allocation5]
    $region101: #{dinov2_coral_forward.1} parent=1 // pred_fallthru
      _
    // Predicated region
    $region102: #{dinov2_coral_forward.1} parent=1 // pred_check
      _
    $region103: #{dinov2_coral_forward.1} parent=1 // pred_check_branch
      %2027 = sbr.rel (0) target = $region105
    $region104: #{dinov2_coral_forward.1} parent=1 // pred_region
      %2028 = dma.done [#allocation3], 96
    $region105: #{dinov2_coral_forward.1} parent=1 // pred_fallthru
      _
    // Predicated region
    $region106: #{dinov2_coral_forward.1} parent=1 // pred_check
      _
    $region107: #{dinov2_coral_forward.1} parent=1 // pred_check_branch
      %2030 = sbr.rel (0) target = $region109
    $region108: #{dinov2_coral_forward.1} parent=1 // pred_region
      %2031 = dma.done [#allocation5], 16
    $region109: #{dinov2_coral_forward.1} parent=1 // pred_fallthru
      _
    %2032 = vsyncpa [#allocation3], 1
    %2033 = vsyncpa [#allocation5], 1

</llo_original>
